<compile_context>
chip_gen: v7x
topology: tpu7x:2x2x1
jax: 0.10.0
libtpu: 0.0.40
codegen_flags: <defaults>
</compile_context>

<pallas_src>
import functools

import jax
import jax.numpy as jnp
from jax.experimental import pallas as pl
from jax.experimental.pallas import tpu as pltpu


# ----------------------------------------------------------------------------- utils
def _round_up(x, m):
    return ((x + m - 1) // m) * m


# ------------------------------------------------------------------- Pallas kernel
def _fused_conv_bn_lrelu_kernel(p_ref, w_ref, g_ref, bt_ref, o_ref,
                                conv_ref, sum_ref, sq_ref, scale_ref, shift_ref,
                                *, tm, m_real, eps, slope):
    p = pl.program_id(0)   # 0 = matmul + batch stats, 1 = normalize + activate + stream out
    i = pl.program_id(1)   # M-tile index

    @pl.when(p == 0)
    def _matmul_and_stats():
        @pl.when(i == 0)
        def _():
            sum_ref[...] = jnp.zeros_like(sum_ref)
            sq_ref[...] = jnp.zeros_like(sq_ref)

        # bf16 operands, f32 accumulation on the MXU. The conv bias is dropped: it
        # cancels exactly under training-mode BatchNorm (mean(conv+b) = mean(conv)+b,
        # var unchanged). With no bias the zero-padded M rows produce exactly 0, so
        # they contribute nothing to the running sums -> no row mask needed.
        conv = jnp.dot(p_ref[...], w_ref[...], preferred_element_type=jnp.float32)
        sum_ref[...] += jnp.sum(conv, axis=0, keepdims=True)
        sq_ref[...] += jnp.sum(conv * conv, axis=0, keepdims=True)

        start = pl.multiple_of(i * tm, tm)
        conv_ref[pl.ds(start, tm), :] = conv

    @pl.when(p == 1)
    def _normalize_and_store():
        @pl.when(i == 0)
        def _():
            cnt = jnp.float32(m_real)
            mean = sum_ref[...] / cnt
            var = jnp.maximum(sq_ref[...] / cnt - mean * mean, 0.0)  # biased var (PyTorch BN)
            scale = g_ref[...] * jax.lax.rsqrt(var + eps)
            scale_ref[...] = scale
            shift_ref[...] = bt_ref[...] - mean * scale

        start = pl.multiple_of(i * tm, tm)
        y = conv_ref[pl.ds(start, tm), :] * scale_ref[...] + shift_ref[...]
        o_ref[...] = jnp.where(y >= 0.0, y, slope * y)


# ------------------------------------------------------------- conv lowering (glue)
def _im2col3d(x_ndhwc, k, stride, pad):
    x = jnp.pad(x_ndhwc, ((0, 0), (pad, pad), (pad, pad), (pad, pad), (0, 0)))
    B, D, H, W, C = x.shape
    OD = (D - k) // stride + 1
    OH = (H - k) // stride + 1
    OW = (W - k) // stride + 1
    cols = []
    for kd in range(k):
        for kh in range(k):
            for kw in range(k):
                cols.append(x[:,
                              kd:kd + stride * (OD - 1) + 1:stride,
                              kh:kh + stride * (OH - 1) + 1:stride,
                              kw:kw + stride * (OW - 1) + 1:stride,
                              :])
    patches = jnp.stack(cols, axis=4)                     # [B, OD, OH, OW, k^3, C]
    return patches.reshape(B * OD * OH * OW, k * k * k * C), (B, OD, OH, OW)


# ------------------------------------------------------------------------- forward
def encoder3d_forward(params, x_ncdhw, *, bn_eps=1e-5, slope=0.2, tm=512):
    w, gamma, beta = params["w"], params["gamma"], params["beta"]
    # params["b"] exists (Conv3d bias) but is mathematically cancelled by training-mode
    # BatchNorm, so it is intentionally not used in the fused kernel.
    cout, cin, kd, kh, kw = w.shape
    assert kd == kh == kw == 4
    k, stride, pad = kd, 2, 1

    x = jnp.transpose(x_ncdhw, (0, 2, 3, 4, 1))           # NCDHW -> NDHWC
    patches, (B, OD, OH, OW) = _im2col3d(x, k, stride, pad)
    M, K = patches.shape
    w_mat = jnp.transpose(w, (2, 3, 4, 1, 0)).reshape(K, cout)   # (k^3*Cin, Cout)

    # Lane/sublane friendly padding: K -> multiple of 128, Cout -> 128-wide slab,
    # M -> multiple of the M tile.
    Kp = _round_up(K, 128)
    Cp = _round_up(max(cout, 128), 128)
    TM = min(tm, _round_up(M, 8))
    Mp = _round_up(M, TM)
    num_m_tiles = Mp // TM

    # bf16 MXU operands (f32 accumulation inside the kernel).
    patches = jnp.pad(patches, ((0, Mp - M), (0, Kp - K))).astype(jnp.bfloat16)
    w_mat = jnp.pad(w_mat, ((0, Kp - K), (0, Cp - cout))).astype(jnp.bfloat16)
    g_p = jnp.pad(gamma, (0, Cp - cout)).reshape(1, Cp).astype(jnp.float32)
    bt_p = jnp.pad(beta, (0, Cp - cout)).reshape(1, Cp).astype(jnp.float32)

    kernel = functools.partial(
        _fused_conv_bn_lrelu_kernel,
        tm=TM, m_real=M, eps=bn_eps, slope=slope)

    out = pl.pallas_call(
        kernel,
        out_shape=jax.ShapeDtypeStruct((Mp, Cp), jnp.float32),
        grid=(2, num_m_tiles),
        in_specs=[
            # patch tiles stream over M in pass 0; pinned to tile 0 during pass 1
            pl.BlockSpec((TM, Kp), lambda p, i: ((1 - p) * i, 0)),
            pl.BlockSpec((Kp, Cp), lambda p, i: (0, 0)),   # weights resident in VMEM
            pl.BlockSpec((1, Cp), lambda p, i: (0, 0)),    # BN gamma
            pl.BlockSpec((1, Cp), lambda p, i: (0, 0)),    # BN beta
        ],
        # resident (block 0) during pass 0, streamed per-tile writeback during pass 1
        out_specs=pl.BlockSpec((TM, Cp), lambda p, i: (p * i, 0)),
        scratch_shapes=[
            pltpu.VMEM((Mp, Cp), jnp.float32),   # VMEM-resident conv result
            pltpu.VMEM((1, Cp), jnp.float32),    # per-channel sum
            pltpu.VMEM((1, Cp), jnp.float32),    # per-channel sum of squares
            pltpu.VMEM((1, Cp), jnp.float32),    # BN scale
            pltpu.VMEM((1, Cp), jnp.float32),    # BN shift
        ],
        compiler_params=pltpu.CompilerParams(
            dimension_semantics=("arbitrary", "arbitrary")),
    )(patches, w_mat, g_p, bt_p)

    y = out[:M, :cout].reshape(B, OD, OH, OW, cout)
    return jnp.transpose(y, (0, 4, 1, 2, 3))               # NDHWC -> NCDHW


# --------------------------------------------------------------------- reference
def _reference(params, x, bn_eps=1e-5, slope=0.2):
    conv = jax.lax.conv_general_dilated(
        x, params["w"], window_strides=(2, 2, 2),
        padding=((1, 1), (1, 1), (1, 1)),
        dimension_numbers=("NCDHW", "OIDHW", "NCDHW"),
        precision=jax.lax.Precision.HIGHEST)
    conv = conv + params["b"].reshape(1, -1, 1, 1, 1)
    mean = conv.mean(axis=(0, 2, 3, 4), keepdims=True)
    var = conv.var(axis=(0, 2, 3, 4), keepdims=True)        # biased, like PyTorch BN
    y = (conv - mean) * jax.lax.rsqrt(var + bn_eps)
    y = y * params["gamma"].reshape(1, -1, 1, 1, 1) + params["beta"].reshape(1, -1, 1, 1, 1)
    return jnp.where(y >= 0, y, slope * y)


# ----------------------------------------------------------------------------- main
if __name__ == "__main__":
    B, Cin, Cout, S = 2, 4, 8, 16
    key = jax.random.PRNGKey(0)
    kw_, kb_, kx_ = jax.random.split(key, 3)

    params = {
        "w": jax.random.normal(kw_, (Cout, Cin, 4, 4, 4), jnp.float32)
             * (2.0 / (Cin * 4 * 4 * 4)) ** 0.5,
        "b": 0.1 * jax.random.normal(kb_, (Cout,), jnp.float32),
        "gamma": jnp.ones((Cout,), jnp.float32),
        "beta": jnp.zeros((Cout,), jnp.float32),
    }
    x = jax.random.normal(kx_, (B, Cin, S, S, S), jnp.float32)

    fwd = jax.jit(encoder3d_forward)
    y = fwd(params, x)
    jax.block_until_ready(y)

    assert y.shape == (B, Cout, S // 2, S // 2, S // 2), y.shape
    assert bool(jnp.all(jnp.isfinite(y)))
    y_ref = _reference(params, x)
    assert bool(jnp.allclose(y, y_ref, atol=5e-2, rtol=5e-2)), \
        float(jnp.max(jnp.abs(y - y_ref)))
    print("KERNEL_OK")
</pallas_src>

<mosaic_0001>
module attributes {stable_mosaic.version = 11 : i64} {
  func.func @_fused_conv_bn_lrelu_kernel(%arg0: i32, %arg1: i32, %arg2: memref<512x256xbf16, #tpu.memory_space<vmem>>, %arg3: memref<256x128xbf16, #tpu.memory_space<vmem>>, %arg4: memref<1x128xf32, #tpu.memory_space<vmem>>, %arg5: memref<1x128xf32, #tpu.memory_space<vmem>>, %arg6: memref<512x128xf32, #tpu.memory_space<vmem>>, %arg7: memref<1024x128xf32, #tpu.memory_space<vmem>>, %arg8: memref<1x128xf32, #tpu.memory_space<vmem>>, %arg9: memref<1x128xf32, #tpu.memory_space<vmem>>, %arg10: memref<1x128xf32, #tpu.memory_space<vmem>>, %arg11: memref<1x128xf32, #tpu.memory_space<vmem>>) attributes {dimension_semantics = [#tpu.dimension_semantics<arbitrary>, #tpu.dimension_semantics<arbitrary>], iteration_bounds = array<i64: 2, 2>, scalar_prefetch = 0 : i64, scratch_operands = 5 : i64, tpu.core_type = #tpu.core_type<tc>, window_params = [{transform_indices = @transform_0, window_bounds = array<i64: 512, 256>}, {pipeline_mode = #tpu.pipeline_mode<synchronous>, transform_indices = @transform_1, window_bounds = array<i64: 256, 128>}, {pipeline_mode = #tpu.pipeline_mode<synchronous>, transform_indices = @transform_2, window_bounds = array<i64: 1, 128>}, {pipeline_mode = #tpu.pipeline_mode<synchronous>, transform_indices = @transform_3, window_bounds = array<i64: 1, 128>}, {transform_indices = @transform_4, window_bounds = array<i64: 512, 128>}]} {
    %c0_i32 = arith.constant 0 : i32
    %0 = arith.cmpi eq, %arg0, %c0_i32 : i32
    %1 = arith.extui %0 : i1 to i32
    %c0_i32_0 = arith.constant 0 : i32
    %2 = arith.cmpi ne, %1, %c0_i32_0 : i32
    scf.if %2 {
      %c0_i32_2 = arith.constant 0 : i32
      %6 = arith.cmpi eq, %arg1, %c0_i32_2 : i32
      %7 = arith.extui %6 : i1 to i32
      %c0_i32_3 = arith.constant 0 : i32
      %8 = arith.cmpi ne, %7, %c0_i32_3 : i32
      scf.if %8 {
        %cst_18 = arith.constant 0.000000e+00 : f32
        %27 = vector.broadcast %cst_18 : f32 to vector<1x128xf32>
        %c0_19 = arith.constant 0 : index
        %c0_20 = arith.constant 0 : index
        %28 = vector.load %arg8[%c0_19, %c0_20] : memref<1x128xf32, #tpu.memory_space<vmem>>, vector<1x128xf32>
        tpu.vector_store %arg8[%c0_19, %c0_20], %27 {strides = array<i32>} : memref<1x128xf32, #tpu.memory_space<vmem>>, vector<1x128xf32>,
        %cst_21 = arith.constant 0.000000e+00 : f32
        %29 = vector.broadcast %cst_21 : f32 to vector<1x128xf32>
        %c0_22 = arith.constant 0 : index
        %c0_23 = arith.constant 0 : index
        %30 = vector.load %arg9[%c0_22, %c0_23] : memref<1x128xf32, #tpu.memory_space<vmem>>, vector<1x128xf32>
        tpu.vector_store %arg9[%c0_22, %c0_23], %29 {strides = array<i32>} : memref<1x128xf32, #tpu.memory_space<vmem>>, vector<1x128xf32>,
      } else {
      }
      %c0 = arith.constant 0 : index
      %c0_4 = arith.constant 0 : index
      %9 = vector.load %arg2[%c0, %c0_4] : memref<512x256xbf16, #tpu.memory_space<vmem>>, vector<512x256xbf16>
      %c0_5 = arith.constant 0 : index
      %c0_6 = arith.constant 0 : index
      %10 = vector.load %arg3[%c0_5, %c0_6] : memref<256x128xbf16, #tpu.memory_space<vmem>>, vector<256x128xbf16>
      %cst = arith.constant dense<0.000000e+00> : vector<512x128xf32>
      %11 = tpu.matmul %9, %10, %cst {dimension_numbers = #tpu.dot_dimension_numbers<[1], [0], [0], [1], [0, 0, 1, 1], [], []>} : vector<512x256xbf16>, vector<256x128xbf16>, vector<512x128xf32> -> vector<512x128xf32>
      %c0_7 = arith.constant 0 : index
      %c0_8 = arith.constant 0 : index
      %12 = vector.load %arg8[%c0_7, %c0_8] : memref<1x128xf32, #tpu.memory_space<vmem>>, vector<1x128xf32>
      %cst_9 = arith.constant dense<0.000000e+00> : vector<128xf32>
      %13 = vector.multi_reduction <add>, %11, %cst_9 [0] : vector<512x128xf32> to vector<128xf32>
      %14 = vector.shape_cast %13 : vector<128xf32> to vector<1x128xf32>
      %15 = arith.addf %12, %14 : vector<1x128xf32>
      %c0_10 = arith.constant 0 : index
      %c0_11 = arith.constant 0 : index
      %16 = vector.load %arg8[%c0_10, %c0_11] : memref<1x128xf32, #tpu.memory_space<vmem>>, vector<1x128xf32>
      tpu.vector_store %arg8[%c0_10, %c0_11], %15 {strides = array<i32>} : memref<1x128xf32, #tpu.memory_space<vmem>>, vector<1x128xf32>,
      %c0_12 = arith.constant 0 : index
      %c0_13 = arith.constant 0 : index
      %17 = vector.load %arg9[%c0_12, %c0_13] : memref<1x128xf32, #tpu.memory_space<vmem>>, vector<1x128xf32>
      %18 = arith.mulf %11, %11 : vector<512x128xf32>
      %cst_14 = arith.constant dense<0.000000e+00> : vector<128xf32>
      %19 = vector.multi_reduction <add>, %18, %cst_14 [0] : vector<512x128xf32> to vector<128xf32>
      %20 = vector.shape_cast %19 : vector<128xf32> to vector<1x128xf32>
      %21 = arith.addf %17, %20 : vector<1x128xf32>
      %c0_15 = arith.constant 0 : index
      %c0_16 = arith.constant 0 : index
      %22 = vector.load %arg9[%c0_15, %c0_16] : memref<1x128xf32, #tpu.memory_space<vmem>>, vector<1x128xf32>
      tpu.vector_store %arg9[%c0_15, %c0_16], %21 {strides = array<i32>} : memref<1x128xf32, #tpu.memory_space<vmem>>, vector<1x128xf32>,
      %c512_i32 = arith.constant 512 : i32
      %23 = arith.muli %arg1, %c512_i32 : i32
      %24 = tpu.assume_multiple %23, 512 : i32
      %25 = arith.index_cast %24 : i32 to index
      %c0_17 = arith.constant 0 : index
      %26 = vector.load %arg7[%25, %c0_17] : memref<1024x128xf32, #tpu.memory_space<vmem>>, vector<512x128xf32>
      tpu.vector_store %arg7[%25, %c0_17], %11 {strides = array<i32>} : memref<1024x128xf32, #tpu.memory_space<vmem>>, vector<512x128xf32>,
    } else {
    }
    %c1_i32 = arith.constant 1 : i32
    %3 = arith.cmpi eq, %arg0, %c1_i32 : i32
    %4 = arith.extui %3 : i1 to i32
    %c0_i32_1 = arith.constant 0 : i32
    %5 = arith.cmpi ne, %4, %c0_i32_1 : i32
    scf.if %5 {
      %c0_i32_2 = arith.constant 0 : i32
      %6 = arith.cmpi eq, %arg1, %c0_i32_2 : i32
      %7 = arith.extui %6 : i1 to i32
      %c0_i32_3 = arith.constant 0 : i32
      %8 = arith.cmpi ne, %7, %c0_i32_3 : i32
      scf.if %8 {
        %c0_11 = arith.constant 0 : index
        %c0_12 = arith.constant 0 : index
        %25 = vector.load %arg8[%c0_11, %c0_12] : memref<1x128xf32, #tpu.memory_space<vmem>>, vector<1x128xf32>
        %cst_13 = arith.constant 1.024000e+03 : f32
        %26 = vector.broadcast %cst_13 : f32 to vector<1x128xf32>
        %27 = arith.divf %25, %26 : vector<1x128xf32>
        %c0_14 = arith.constant 0 : index
        %c0_15 = arith.constant 0 : index
        %28 = vector.load %arg9[%c0_14, %c0_15] : memref<1x128xf32, #tpu.memory_space<vmem>>, vector<1x128xf32>
        %cst_16 = arith.constant 1.024000e+03 : f32
        %29 = vector.broadcast %cst_16 : f32 to vector<1x128xf32>
        %30 = arith.divf %28, %29 : vector<1x128xf32>
        %31 = arith.mulf %27, %27 : vector<1x128xf32>
        %32 = arith.subf %30, %31 : vector<1x128xf32>
        %cst_17 = arith.constant 0.000000e+00 : f32
        %33 = vector.broadcast %cst_17 : f32 to vector<1x128xf32>
        %34 = arith.maximumf %32, %33 : vector<1x128xf32>
        %c0_18 = arith.constant 0 : index
        %c0_19 = arith.constant 0 : index
        %35 = vector.load %arg4[%c0_18, %c0_19] : memref<1x128xf32, #tpu.memory_space<vmem>>, vector<1x128xf32>
        %cst_20 = arith.constant 9.99999974E-6 : f32
        %36 = vector.broadcast %cst_20 : f32 to vector<1x128xf32>
        %37 = arith.addf %34, %36 : vector<1x128xf32>
        %38 = math.rsqrt %37 : vector<1x128xf32>
        %39 = arith.mulf %35, %38 : vector<1x128xf32>
        %c0_21 = arith.constant 0 : index
        %c0_22 = arith.constant 0 : index
        %40 = vector.load %arg10[%c0_21, %c0_22] : memref<1x128xf32, #tpu.memory_space<vmem>>, vector<1x128xf32>
        tpu.vector_store %arg10[%c0_21, %c0_22], %39 {strides = array<i32>} : memref<1x128xf32, #tpu.memory_space<vmem>>, vector<1x128xf32>,
        %c0_23 = arith.constant 0 : index
        %c0_24 = arith.constant 0 : index
        %41 = vector.load %arg5[%c0_23, %c0_24] : memref<1x128xf32, #tpu.memory_space<vmem>>, vector<1x128xf32>
        %42 = arith.mulf %27, %39 : vector<1x128xf32>
        %43 = arith.subf %41, %42 : vector<1x128xf32>
        %c0_25 = arith.constant 0 : index
        %c0_26 = arith.constant 0 : index
        %44 = vector.load %arg11[%c0_25, %c0_26] : memref<1x128xf32, #tpu.memory_space<vmem>>, vector<1x128xf32>
        tpu.vector_store %arg11[%c0_25, %c0_26], %43 {strides = array<i32>} : memref<1x128xf32, #tpu.memory_space<vmem>>, vector<1x128xf32>,
      } else {
      }
      %c512_i32 = arith.constant 512 : i32
      %9 = arith.muli %arg1, %c512_i32 : i32
      %10 = tpu.assume_multiple %9, 512 : i32
      %11 = arith.index_cast %10 : i32 to index
      %c0 = arith.constant 0 : index
      %12 = vector.load %arg7[%11, %c0] : memref<1024x128xf32, #tpu.memory_space<vmem>>, vector<512x128xf32>
      %c0_4 = arith.constant 0 : index
      %c0_5 = arith.constant 0 : index
      %13 = vector.load %arg10[%c0_4, %c0_5] : memref<1x128xf32, #tpu.memory_space<vmem>>, vector<1x128xf32>
      %14 = vector.broadcast %13 : vector<1x128xf32> to vector<512x128xf32>
      %15 = arith.mulf %12, %14 : vector<512x128xf32>
      %c0_6 = arith.constant 0 : index
      %c0_7 = arith.constant 0 : index
      %16 = vector.load %arg11[%c0_6, %c0_7] : memref<1x128xf32, #tpu.memory_space<vmem>>, vector<1x128xf32>
      %17 = vector.broadcast %16 : vector<1x128xf32> to vector<512x128xf32>
      %18 = arith.addf %15, %17 : vector<512x128xf32>
      %cst = arith.constant 0.000000e+00 : f32
      %19 = vector.broadcast %cst : f32 to vector<512x128xf32>
      %20 = arith.cmpf oge, %18, %19 : vector<512x128xf32>
      %cst_8 = arith.constant 2.000000e-01 : f32
      %21 = vector.broadcast %cst_8 : f32 to vector<512x128xf32>
      %22 = arith.mulf %21, %18 : vector<512x128xf32>
      %23 = arith.select %20, %18, %22 : vector<512x128xi1>, vector<512x128xf32>
      %c0_9 = arith.constant 0 : index
      %c0_10 = arith.constant 0 : index
      %24 = vector.load %arg6[%c0_9, %c0_10] : memref<512x128xf32, #tpu.memory_space<vmem>>, vector<512x128xf32>
      tpu.vector_store %arg6[%c0_9, %c0_10], %23 {strides = array<i32>} : memref<512x128xf32, #tpu.memory_space<vmem>>, vector<512x128xf32>,
    } else {
    }
    return
  }
  func.func @transform_0(%arg0: i32, %arg1: i32) -> (i32, i32) {
    %c1_i32 = arith.constant 1 : i32
    %0 = arith.subi %c1_i32, %arg0 : i32
    %1 = arith.muli %0, %arg1 : i32
    %c0_i32 = arith.constant 0 : i32
    %c0_i32_0 = arith.constant 0 : i32
    return %1, %c0_i32 : i32, i32
  }
  func.func @transform_1(%arg0: i32, %arg1: i32) -> (i32, i32) {
    %c0_i32 = arith.constant 0 : i32
    %c0_i32_0 = arith.constant 0 : i32
    %c0_i32_1 = arith.constant 0 : i32
    return %c0_i32, %c0_i32_0 : i32, i32
  }
  func.func @transform_2(%arg0: i32, %arg1: i32) -> (i32, i32) {
    %c0_i32 = arith.constant 0 : i32
    %c0_i32_0 = arith.constant 0 : i32
    %c0_i32_1 = arith.constant 0 : i32
    return %c0_i32, %c0_i32_0 : i32, i32
  }
  func.func @transform_3(%arg0: i32, %arg1: i32) -> (i32, i32) {
    %c0_i32 = arith.constant 0 : i32
    %c0_i32_0 = arith.constant 0 : i32
    %c0_i32_1 = arith.constant 0 : i32
    return %c0_i32, %c0_i32_0 : i32, i32
  }
  func.func @transform_4(%arg0: i32, %arg1: i32) -> (i32, i32) {
    %0 = arith.muli %arg0, %arg1 : i32
    %c0_i32 = arith.constant 0 : i32
    %c0_i32_0 = arith.constant 0 : i32
    return %0, %c0_i32 : i32, i32
  }
}

</mosaic_0001>

<llo_original>
// kernel: encoder3d_forward.1
$region0: #{encoder3d_forward.1}
  #allocation0 [shape = 'u32[]', space=smem, size = 0x4, offset = 0x4, fixed_abs, tag = 'smem constant byte address 0x4 - core index']
  #allocation1 [shape = 'u32[144,128]{1,0:T(1,128)}', space=vmem, size = 0x12000, scoped, tag = 'internal scratch']
  #allocation2 [shape = 'f32[1024,128]{1,0:T(8,128)}', space=vmem, size = 0x80000, scoped, tag = 'scratch operand']
  #allocation3 [shape = 'f32[1,128]{1,0:T(1,128)}', space=vmem, size = 0x200, scoped, tag = 'scratch operand']
  #allocation4 [shape = 'f32[1,128]{1,0:T(1,128)}', space=vmem, size = 0x200, scoped, tag = 'scratch operand']
  #allocation5 [shape = 'f32[1,128]{1,0:T(1,128)}', space=vmem, size = 0x200, scoped, tag = 'scratch operand']
  #allocation6 [shape = 'f32[1,128]{1,0:T(1,128)}', space=vmem, size = 0x200, scoped, tag = 'scratch operand']
  %s0 = inlined_call_operand.vmem [shape: bf16[1024,256], index: 0, kind: input, shape index: {}]
  %s1 = inlined_call_operand.vmem [shape: bf16[256,128], index: 1, kind: input, shape index: {}]
  %s2 = inlined_call_operand.vmem [shape: f32[1,128], index: 2, kind: input, shape index: {}]
  %s3 = inlined_call_operand.vmem [shape: f32[1,128], index: 3, kind: input, shape index: {}]
  %s4 = inlined_call_operand.vmem [shape: f32[1024,128], index: 4, kind: output, shape index: {}]
  %s5 = sld [smem:[#allocation0]]
  $region65: #{encoder3d_forward.1} parent=0
    _
  %s7 = ssub.s32 1, %s5
  %s8 = scalar_select 0, %s7, %s5
  loop: start=0, step=1, limit=6
  $region2: #{encoder3d_forward.1} parent=0 // loop_pre_header
    _
  $region3: #{encoder3d_forward.1} parent=0 // loop_header
    %s10 = sphi 0, %s14
    %p11 = scmp.ge.s32.totalorder %s10, 6
    %s17 = sphi 0, %s29
    %s18 = sphi 0, %s25
    %s19 = sphi 0, %s17
    %s20 = sphi 0, %s18
    %s21 = sphi 0, %s19
    %s22 = sphi 0, %s20
    %s36 = sphi 0, %s38
    %s39 = sphi 0, %s36
    %s40 = sphi 0, %s39
    %s56 = sphi 0, %s40
    %s60 = sphi 0, %s60
    %s62 = sphi 0, %s60
    %s63 = sphi 0, %s62
    %s77 = sphi 0, %s63
    %s81 = sphi 0, %s81
    %s83 = sphi 0, %s81
    %s84 = sphi 0, %s83
    %s98 = sphi 0, %s84
    %s102 = sphi 0, %s102
    %s104 = sphi 0, %s102
    %s105 = sphi 0, %s104
    %s119 = sphi 0, %s105
    %s127 = sphi 0, %s129
    %s130 = sphi 0, %s127
    %s131 = sphi 0, %s130
    %s147 = sphi 0, %s131
  $region4: #{encoder3d_forward.1} parent=0 // loop_header_branch
    %13 = sbr.rel (%p11) target = $region8
  $region5: #{encoder3d_forward.1} parent=0 // loop_body
    %s15 = ssub.s32 %s10, 1
    %s16 = ssub.s32 %s10, 2
    %s23 = sadd.s32 1, %s18
    %p24 = scmp.ge.s32.totalorder %s23, 2
    %s25 = scalar_select %p24, 0, %s23
    %s26 = sadd.s32 1, %s17
    %s27 = scalar_select %p24, %s26, %s17
    %p28 = scmp.ge.s32.totalorder %s27, 2
    %s29 = scalar_select %p28, 0, %s27
    %s30 = ssub.s32 1, %s17
    %s31 = smul.u32 %s30, %s18
    %s32 = ssub.s32 1, %s29
    %s33 = smul.u32 %s32, %s25
    %s34 = ssub.s32 %s31, %s33
    %p35 = scmp.eq.s32.totalorder %s34, 0
    %s37 = sadd.s32 %s36, 1
    %s38 = scalar_select %p35, %s36, %s37
    %p41 = pneg %p35
    %p42 = scmp.eq.s32.totalorder %s10, 3
    %p43 = por %p41, %p42
    %p44 = scmp.ne.s32.totalorder %s36, %s39
    %p45 = scmp.eq.s32.totalorder %s10, 0
    %p46 = por %p44, %p45
    %p47 = scmp.ne.s32.totalorder %s36, %s39
    %p48 = scmp.eq.s32.totalorder %s15, 3
    %p49 = por %p47, %p48
    %p50 = scmp.ne.s32.totalorder %s39, %s40
    %p51 = scmp.eq.s32.totalorder %s15, 0
    %p52 = por %p50, %p51
    %p53 = scmp.ne.s32.totalorder %s39, %s40
    %p54 = scmp.eq.s32.totalorder %s16, 3
    %p55 = por %p53, %p54
    %p57 = scmp.ne.s32.totalorder %s40, %s56
    %p58 = scmp.eq.s32.totalorder %s16, 0
    %p59 = por %p57, %p58
    %s61 = sadd.s32 %s60, 1
    %p64 = scmp.eq.s32.totalorder %s10, 3
    %p65 = scmp.ne.s32.totalorder %s60, %s62
    %p66 = scmp.eq.s32.totalorder %s10, 0
    %p67 = por %p65, %p66
    %p68 = scmp.ne.s32.totalorder %s60, %s62
    %p69 = scmp.eq.s32.totalorder %s15, 3
    %p70 = por %p68, %p69
    %p71 = scmp.ne.s32.totalorder %s62, %s63
    %p72 = scmp.eq.s32.totalorder %s15, 0
    %p73 = por %p71, %p72
    %p74 = scmp.ne.s32.totalorder %s62, %s63
    %p75 = scmp.eq.s32.totalorder %s16, 3
    %p76 = por %p74, %p75
    %p78 = scmp.ne.s32.totalorder %s63, %s77
    %p79 = scmp.eq.s32.totalorder %s16, 0
    %p80 = por %p78, %p79
    %s82 = sadd.s32 %s81, 1
    %p85 = scmp.eq.s32.totalorder %s10, 3
    %p86 = scmp.ne.s32.totalorder %s81, %s83
    %p87 = scmp.eq.s32.totalorder %s10, 0
    %p88 = por %p86, %p87
    %p89 = scmp.ne.s32.totalorder %s81, %s83
    %p90 = scmp.eq.s32.totalorder %s15, 3
    %p91 = por %p89, %p90
    %p92 = scmp.ne.s32.totalorder %s83, %s84
    %p93 = scmp.eq.s32.totalorder %s15, 0
    %p94 = por %p92, %p93
    %p95 = scmp.ne.s32.totalorder %s83, %s84
    %p96 = scmp.eq.s32.totalorder %s16, 3
    %p97 = por %p95, %p96
    %p99 = scmp.ne.s32.totalorder %s84, %s98
    %p100 = scmp.eq.s32.totalorder %s16, 0
    %p101 = por %p99, %p100
    %s103 = sadd.s32 %s102, 1
    %p106 = scmp.eq.s32.totalorder %s10, 3
    %p107 = scmp.ne.s32.totalorder %s102, %s104
    %p108 = scmp.eq.s32.totalorder %s10, 0
    %p109 = por %p107, %p108
    %p110 = scmp.ne.s32.totalorder %s102, %s104
    %p111 = scmp.eq.s32.totalorder %s15, 3
    %p112 = por %p110, %p111
    %p113 = scmp.ne.s32.totalorder %s104, %s105
    %p114 = scmp.eq.s32.totalorder %s15, 0
    %p115 = por %p113, %p114
    %p116 = scmp.ne.s32.totalorder %s104, %s105
    %p117 = scmp.eq.s32.totalorder %s16, 3
    %p118 = por %p116, %p117
    %p120 = scmp.ne.s32.totalorder %s105, %s119
    %p121 = scmp.eq.s32.totalorder %s16, 0
    %p122 = por %p120, %p121
    %s123 = smul.u32 %s17, %s18
    %s124 = smul.u32 %s29, %s25
    %s125 = ssub.s32 %s123, %s124
    %p126 = scmp.eq.s32.totalorder %s125, 0
    %s128 = sadd.s32 %s127, 1
    %s129 = scalar_select %p126, %s127, %s128
    %p132 = pneg %p126
    %p133 = scmp.eq.s32.totalorder %s10, 3
    %p134 = por %p132, %p133
    %p135 = scmp.ne.s32.totalorder %s127, %s130
    %p136 = scmp.eq.s32.totalorder %s10, 0
    %p137 = por %p135, %p136
    %p138 = scmp.ne.s32.totalorder %s127, %s130
    %p139 = scmp.eq.s32.totalorder %s15, 3
    %p140 = por %p138, %p139
    %p141 = scmp.ne.s32.totalorder %s130, %s131
    %p142 = scmp.eq.s32.totalorder %s15, 0
    %p143 = por %p141, %p142
    %p144 = scmp.ne.s32.totalorder %s130, %s131
    %p145 = scmp.eq.s32.totalorder %s16, 3
    %p146 = por %p144, %p145
    %p148 = scmp.ne.s32.totalorder %s131, %s147
    %p149 = scmp.eq.s32.totalorder %s16, 0
    %p150 = por %p148, %p149
    %p151 = scmp.le.s32.totalorder 1, %s10
    %p152 = scmp.lt.s32.totalorder %s10, 5
    %p153 = pnand %p151, %p152
    %p154 = pneg %p153
    // Predicated region
    $region9: #{encoder3d_forward.1} parent=5 // pred_check
      _
    $region10: #{encoder3d_forward.1} parent=5 // pred_check_branch
      %156 = sbr.rel (%p153) target = $region12
    $region11: #{encoder3d_forward.1} parent=5 // pred_region
      %s157 = ssub.s32 %s10, 1
      // Predicated region
      $region13: #{encoder3d_forward.1} parent=11 // pred_check
        %p158 = pneg %p73
      $region14: #{encoder3d_forward.1} parent=11 // pred_check_branch
        %160 = sbr.rel (%p158) target = $region16
      $region15: #{encoder3d_forward.1} parent=11 // pred_region
        _
      $region16: #{encoder3d_forward.1} parent=11 // pred_fallthru
        _
      // Predicated region
      $region17: #{encoder3d_forward.1} parent=11 // pred_check
        %p161 = pneg %p94
      $region18: #{encoder3d_forward.1} parent=11 // pred_check_branch
        %163 = sbr.rel (%p161) target = $region20
      $region19: #{encoder3d_forward.1} parent=11 // pred_region
        _
      $region20: #{encoder3d_forward.1} parent=11 // pred_fallthru
        _
      // Predicated region
      $region21: #{encoder3d_forward.1} parent=11 // pred_check
        %p164 = pneg %p115
      $region22: #{encoder3d_forward.1} parent=11 // pred_check_branch
        %166 = sbr.rel (%p164) target = $region24
      $region23: #{encoder3d_forward.1} parent=11 // pred_region
        _
      $region24: #{encoder3d_forward.1} parent=11 // pred_fallthru
        _
    $region12: #{encoder3d_forward.1} parent=5 // pred_fallthru
      _
    %p167 = scmp.lt.s32.totalorder %s10, 4
    // Predicated region
    $region25: #{encoder3d_forward.1} parent=5 // pred_check
      %p168 = pneg %p167
    $region26: #{encoder3d_forward.1} parent=5 // pred_check_branch
      %170 = sbr.rel (%p168) target = $region28
    $region27: #{encoder3d_forward.1} parent=5 // pred_region
      // Predicated region
      $region29: #{encoder3d_forward.1} parent=27 // pred_check
        %p171 = pneg %p46
      $region30: #{encoder3d_forward.1} parent=27 // pred_check_branch
        %173 = sbr.rel (%p171) target = $region32
      $region31: #{encoder3d_forward.1} parent=27 // pred_region
        %s174 = ssub.s32 1, %s17
        %s175 = smul.u32 %s174, %s18
        %s176 = smul.u32 64, %s175
        %p177 = scmp.lt.s32.totalorder %s176, 127
        %s178 = scalar_select %p177, %s176, 127
        %s179 = smul.addr %s178, 2
        %s180 = smul.addr %s179, 4
        %s181 = scalar_lea.vmem %s0, %s180
        %s182 = ssub.s32 1, %s17
        %s183 = smul.u32 %s182, %s18
        %s184 = smul.u32 64, %s183
      $region32: #{encoder3d_forward.1} parent=27 // pred_fallthru
        _
    $region28: #{encoder3d_forward.1} parent=5 // pred_fallthru
      _
    %p185 = scmp.le.s32.totalorder 1, %s10
    %p186 = scmp.lt.s32.totalorder %s10, 5
    %p187 = pnand %p185, %p186
    %p188 = pneg %p187
    // Predicated region
    $region33: #{encoder3d_forward.1} parent=5 // pred_check
      _
    $region34: #{encoder3d_forward.1} parent=5 // pred_check_branch
      %190 = sbr.rel (%p187) target = $region36
    $region35: #{encoder3d_forward.1} parent=5 // pred_region
      %s191 = ssub.s32 %s10, 1
      %s192 = ssub.s32 1, %s19
      %s193 = smul.u32 %s192, %s20
      %s194 = smul.u32 64, %s193
      %p195 = scmp.lt.s32.totalorder %s194, 127
      %s196 = scalar_select %p195, %s194, 127
      %s197 = smul.addr %s196, 2
      %s198 = smul.addr %s197, 4
      %s199 = scalar_lea.vmem %s0, %s198
      %p200 = pneg %p52
      %p201 = pneg %p49
      %p202 = pneg %p73
      %p203 = pneg %p70
      %p204 = pneg %p94
      %p205 = pneg %p91
      %p206 = pneg %p115
      %p207 = pneg %p112
      %p208 = pneg %p143
      %p209 = pneg %p140
      %s210 = smul.u32 %s19, %s20
      %s211 = smul.u32 64, %s210
      %p212 = scmp.lt.s32.totalorder %s211, 127
      %s213 = scalar_select %p212, %s211, 127
      %s214 = smul.addr %s213, 8
      %s215 = scalar_lea.vmem %s4, %s214
      %s216 = ssub.s32 1, %s19
      %s217 = smul.u32 %s216, %s20
      %s218 = smul.u32 64, %s217
      %p219 = scmp.lt.s32.totalorder %s218, 127
      %s220 = scalar_select %p219, %s218, 127
      %s221 = smul.addr %s220, 2
      %s222 = smul.addr %s221, 4
      %s223 = scalar_lea.vmem %s0, %s222
      %s224 = ssub.s32 1, %s19
      %s225 = smul.u32 %s224, %s20
      %s226 = smul.u32 64, %s225
      %s227 = smul.u32 %s19, %s20
      %s228 = smul.u32 64, %s227
      %p229 = scmp.lt.s32.totalorder %s228, 127
      %s230 = scalar_select %p229, %s228, 127
      %s231 = smul.addr %s230, 8
      %s232 = scalar_lea.vmem %s4, %s231
      %s233 = smul.u32 %s19, %s20
      %s234 = smul.u32 64, %s233
      %p236 = scmp.eq.s32.totalorder %s19, 0
      // Predicated region
      $region37: #{encoder3d_forward.1} parent=35 // pred_check
        %p237 = pneg %p236
      $region38: #{encoder3d_forward.1} parent=35 // pred_check_branch
        %239 = sbr.rel (%p237) target = $region40
      $region39: #{encoder3d_forward.1} parent=35 // pred_region
        %p240 = scmp.eq.s32.totalorder %s20, 0
        // Predicated region
        $region41: #{encoder3d_forward.1} parent=39 // pred_check
          %p241 = pneg %p240
        $region42: #{encoder3d_forward.1} parent=39 // pred_check_branch
          %243 = sbr.rel (%p241) target = $region44
        $region43: #{encoder3d_forward.1} parent=39 // pred_region
          %244 = vst [vmem:[#allocation3] sm:$0x1] 0.0
          %245 = vst [vmem:[#allocation4] sm:$0x1] 0.0
        $region44: #{encoder3d_forward.1} parent=39 // pred_fallthru
          _
        %v246 = vld [vmem:[%s223] sm:$0xff]
        %v247 = vld [vmem:[%s223 + $0x8] sm:$0xff]
        %v248 = vld [vmem:[%s223 + $0x10] sm:$0xff]
        %v249 = vld [vmem:[%s223 + $0x18] sm:$0xff]
        %v250 = vld [vmem:[%s223 + $0x20] sm:$0xff]
        %v251 = vld [vmem:[%s223 + $0x28] sm:$0xff]
        %v252 = vld [vmem:[%s223 + $0x30] sm:$0xff]
        %v253 = vld [vmem:[%s223 + $0x38] sm:$0xff]
        %v254 = vld [vmem:[%s223 + $0x40] sm:$0xff]
        %v255 = vld [vmem:[%s223 + $0x48] sm:$0xff]
        %v256 = vld [vmem:[%s223 + $0x50] sm:$0xff]
        %v257 = vld [vmem:[%s223 + $0x58] sm:$0xff]
        %v258 = vld [vmem:[%s223 + $0x60] sm:$0xff]
        %v259 = vld [vmem:[%s223 + $0x68] sm:$0xff]
        %v260 = vld [vmem:[%s223 + $0x70] sm:$0xff]
        %v261 = vld [vmem:[%s223 + $0x78] sm:$0xff]
        %v262 = vld [vmem:[%s223 + $0x80] sm:$0xff]
        %v263 = vld [vmem:[%s223 + $0x88] sm:$0xff]
        %v264 = vld [vmem:[%s223 + $0x90] sm:$0xff]
        %v265 = vld [vmem:[%s223 + $0x98] sm:$0xff]
        %v266 = vld [vmem:[%s223 + $0xa0] sm:$0xff]
        %v267 = vld [vmem:[%s223 + $0xa8] sm:$0xff]
        %v268 = vld [vmem:[%s223 + $0xb0] sm:$0xff]
        %v269 = vld [vmem:[%s223 + $0xb8] sm:$0xff]
        %v270 = vld [vmem:[%s223 + $0xc0] sm:$0xff]
        %v271 = vld [vmem:[%s223 + $0xc8] sm:$0xff]
        %v272 = vld [vmem:[%s223 + $0xd0] sm:$0xff]
        %v273 = vld [vmem:[%s223 + $0xd8] sm:$0xff]
        %v274 = vld [vmem:[%s223 + $0xe0] sm:$0xff]
        %v275 = vld [vmem:[%s223 + $0xe8] sm:$0xff]
        %v276 = vld [vmem:[%s223 + $0xf0] sm:$0xff]
        %v277 = vld [vmem:[%s223 + $0xf8] sm:$0xff]
        %v278 = vld [vmem:[%s223 + $0x100] sm:$0xff]
        %v279 = vld [vmem:[%s223 + $0x108] sm:$0xff]
        %v280 = vld [vmem:[%s223 + $0x110] sm:$0xff]
        %v281 = vld [vmem:[%s223 + $0x118] sm:$0xff]
        %v282 = vld [vmem:[%s223 + $0x120] sm:$0xff]
        %v283 = vld [vmem:[%s223 + $0x128] sm:$0xff]
        %v284 = vld [vmem:[%s223 + $0x130] sm:$0xff]
        %v285 = vld [vmem:[%s223 + $0x138] sm:$0xff]
        %v286 = vld [vmem:[%s223 + $0x140] sm:$0xff]
        %v287 = vld [vmem:[%s223 + $0x148] sm:$0xff]
        %v288 = vld [vmem:[%s223 + $0x150] sm:$0xff]
        %v289 = vld [vmem:[%s223 + $0x158] sm:$0xff]
        %v290 = vld [vmem:[%s223 + $0x160] sm:$0xff]
        %v291 = vld [vmem:[%s223 + $0x168] sm:$0xff]
        %v292 = vld [vmem:[%s223 + $0x170] sm:$0xff]
        %v293 = vld [vmem:[%s223 + $0x178] sm:$0xff]
        %v294 = vld [vmem:[%s223 + $0x180] sm:$0xff]
        %v295 = vld [vmem:[%s223 + $0x188] sm:$0xff]
        %v296 = vld [vmem:[%s223 + $0x190] sm:$0xff]
        %v297 = vld [vmem:[%s223 + $0x198] sm:$0xff]
        %v298 = vld [vmem:[%s223 + $0x1a0] sm:$0xff]
        %v299 = vld [vmem:[%s223 + $0x1a8] sm:$0xff]
        %v300 = vld [vmem:[%s223 + $0x1b0] sm:$0xff]
        %v301 = vld [vmem:[%s223 + $0x1b8] sm:$0xff]
        %v302 = vld [vmem:[%s223 + $0x1c0] sm:$0xff]
        %v303 = vld [vmem:[%s223 + $0x1c8] sm:$0xff]
        %v304 = vld [vmem:[%s223 + $0x1d0] sm:$0xff]
        %v305 = vld [vmem:[%s223 + $0x1d8] sm:$0xff]
        %v306 = vld [vmem:[%s223 + $0x1e0] sm:$0xff]
        %v307 = vld [vmem:[%s223 + $0x1e8] sm:$0xff]
        %v308 = vld [vmem:[%s223 + $0x1f0] sm:$0xff]
        %v309 = vld [vmem:[%s223 + $0x1f8] sm:$0xff]
        %v310 = vld [vmem:[%s1] sm:$0xf]
        %v311 = vld [vmem:[%s1 + $0x4] sm:$0xf]
        %v312 = vld [vmem:[%s1 + $0x8] sm:$0xf]
        %v313 = vld [vmem:[%s1 + $0xc] sm:$0xf]
        %v314 = vld [vmem:[%s1 + $0x10] sm:$0xf]
        %v315 = vld [vmem:[%s1 + $0x14] sm:$0xf]
        %v316 = vld [vmem:[%s1 + $0x18] sm:$0xf]
        %v317 = vld [vmem:[%s1 + $0x1c] sm:$0xf]
        %v318 = vld [vmem:[%s1 + $0x20] sm:$0xf]
        %v319 = vld [vmem:[%s1 + $0x24] sm:$0xf]
        %v320 = vld [vmem:[%s1 + $0x28] sm:$0xf]
        %v321 = vld [vmem:[%s1 + $0x2c] sm:$0xf]
        %v322 = vld [vmem:[%s1 + $0x30] sm:$0xf]
        %v323 = vld [vmem:[%s1 + $0x34] sm:$0xf]
        %v324 = vld [vmem:[%s1 + $0x38] sm:$0xf]
        %v325 = vld [vmem:[%s1 + $0x3c] sm:$0xf]
        %v326 = vld [vmem:[%s1 + $0x40] sm:$0xf]
        %v327 = vld [vmem:[%s1 + $0x44] sm:$0xf]
        %v328 = vld [vmem:[%s1 + $0x48] sm:$0xf]
        %v329 = vld [vmem:[%s1 + $0x4c] sm:$0xf]
        %v330 = vld [vmem:[%s1 + $0x50] sm:$0xf]
        %v331 = vld [vmem:[%s1 + $0x54] sm:$0xf]
        %v332 = vld [vmem:[%s1 + $0x58] sm:$0xf]
        %v333 = vld [vmem:[%s1 + $0x5c] sm:$0xf]
        %v334 = vld [vmem:[%s1 + $0x60] sm:$0xf]
        %v335 = vld [vmem:[%s1 + $0x64] sm:$0xf]
        %v336 = vld [vmem:[%s1 + $0x68] sm:$0xf]
        %v337 = vld [vmem:[%s1 + $0x6c] sm:$0xf]
        %v338 = vld [vmem:[%s1 + $0x70] sm:$0xf]
        %v339 = vld [vmem:[%s1 + $0x74] sm:$0xf]
        %v340 = vld [vmem:[%s1 + $0x78] sm:$0xf]
        %v341 = vld [vmem:[%s1 + $0x7c] sm:$0xf]
        %v406 = vunpack.c.l.b16 %v246
        %v407 = vunpack.c.h.b16 %v246
        %v408 = vunpack.c.l.b16 %v247
        %v409 = vunpack.c.h.b16 %v247
        %v410 = vunpack.c.l.b16 %v248
        %v411 = vunpack.c.h.b16 %v248
        %v412 = vunpack.c.l.b16 %v249
        %v413 = vunpack.c.h.b16 %v249
        %v414 = vunpack.c.l.b16 %v250
        %v415 = vunpack.c.h.b16 %v250
        %v416 = vunpack.c.l.b16 %v251
        %v417 = vunpack.c.h.b16 %v251
        %v418 = vunpack.c.l.b16 %v252
        %v419 = vunpack.c.h.b16 %v252
        %v420 = vunpack.c.l.b16 %v253
        %v421 = vunpack.c.h.b16 %v253
        %v422 = vunpack.c.l.b16 %v254
        %v423 = vunpack.c.h.b16 %v254
        %v424 = vunpack.c.l.b16 %v255
        %v425 = vunpack.c.h.b16 %v255
        %v426 = vunpack.c.l.b16 %v256
        %v427 = vunpack.c.h.b16 %v256
        %v428 = vunpack.c.l.b16 %v257
        %v429 = vunpack.c.h.b16 %v257
        %v430 = vunpack.c.l.b16 %v258
        %v431 = vunpack.c.h.b16 %v258
        %v432 = vunpack.c.l.b16 %v259
        %v433 = vunpack.c.h.b16 %v259
        %v434 = vunpack.c.l.b16 %v260
        %v435 = vunpack.c.h.b16 %v260
        %v436 = vunpack.c.l.b16 %v261
        %v437 = vunpack.c.h.b16 %v261
        %v438 = vunpack.c.l.b16 %v262
        %v439 = vunpack.c.h.b16 %v262
        %v440 = vunpack.c.l.b16 %v263
        %v441 = vunpack.c.h.b16 %v263
        %v442 = vunpack.c.l.b16 %v264
        %v443 = vunpack.c.h.b16 %v264
        %v444 = vunpack.c.l.b16 %v265
        %v445 = vunpack.c.h.b16 %v265
        %v446 = vunpack.c.l.b16 %v266
        %v447 = vunpack.c.h.b16 %v266
        %v448 = vunpack.c.l.b16 %v267
        %v449 = vunpack.c.h.b16 %v267
        %v450 = vunpack.c.l.b16 %v268
        %v451 = vunpack.c.h.b16 %v268
        %v452 = vunpack.c.l.b16 %v269
        %v453 = vunpack.c.h.b16 %v269
        %v454 = vunpack.c.l.b16 %v270
        %v455 = vunpack.c.h.b16 %v270
        %v456 = vunpack.c.l.b16 %v271
        %v457 = vunpack.c.h.b16 %v271
        %v458 = vunpack.c.l.b16 %v272
        %v459 = vunpack.c.h.b16 %v272
        %v460 = vunpack.c.l.b16 %v273
        %v461 = vunpack.c.h.b16 %v273
        %v462 = vunpack.c.l.b16 %v274
        %v463 = vunpack.c.h.b16 %v274
        %v464 = vunpack.c.l.b16 %v275
        %v465 = vunpack.c.h.b16 %v275
        %v466 = vunpack.c.l.b16 %v276
        %v467 = vunpack.c.h.b16 %v276
        %v468 = vunpack.c.l.b16 %v277
        %v469 = vunpack.c.h.b16 %v277
        %v470 = vunpack.c.l.b16 %v278
        %v471 = vunpack.c.h.b16 %v278
        %v472 = vunpack.c.l.b16 %v279
        %v473 = vunpack.c.h.b16 %v279
        %v474 = vunpack.c.l.b16 %v280
        %v475 = vunpack.c.h.b16 %v280
        %v476 = vunpack.c.l.b16 %v281
        %v477 = vunpack.c.h.b16 %v281
        %v478 = vunpack.c.l.b16 %v282
        %v479 = vunpack.c.h.b16 %v282
        %v480 = vunpack.c.l.b16 %v283
        %v481 = vunpack.c.h.b16 %v283
        %v482 = vunpack.c.l.b16 %v284
        %v483 = vunpack.c.h.b16 %v284
        %v484 = vunpack.c.l.b16 %v285
        %v485 = vunpack.c.h.b16 %v285
        %v486 = vunpack.c.l.b16 %v286
        %v487 = vunpack.c.h.b16 %v286
        %v488 = vunpack.c.l.b16 %v287
        %v489 = vunpack.c.h.b16 %v287
        %v490 = vunpack.c.l.b16 %v288
        %v491 = vunpack.c.h.b16 %v288
        %v492 = vunpack.c.l.b16 %v289
        %v493 = vunpack.c.h.b16 %v289
        %v494 = vunpack.c.l.b16 %v290
        %v495 = vunpack.c.h.b16 %v290
        %v496 = vunpack.c.l.b16 %v291
        %v497 = vunpack.c.h.b16 %v291
        %v498 = vunpack.c.l.b16 %v292
        %v499 = vunpack.c.h.b16 %v292
        %v500 = vunpack.c.l.b16 %v293
        %v501 = vunpack.c.h.b16 %v293
        %v502 = vunpack.c.l.b16 %v294
        %v503 = vunpack.c.h.b16 %v294
        %v504 = vunpack.c.l.b16 %v295
        %v505 = vunpack.c.h.b16 %v295
        %v506 = vunpack.c.l.b16 %v296
        %v507 = vunpack.c.h.b16 %v296
        %v508 = vunpack.c.l.b16 %v297
        %v509 = vunpack.c.h.b16 %v297
        %v510 = vunpack.c.l.b16 %v298
        %v511 = vunpack.c.h.b16 %v298
        %v512 = vunpack.c.l.b16 %v299
        %v513 = vunpack.c.h.b16 %v299
        %v514 = vunpack.c.l.b16 %v300
        %v515 = vunpack.c.h.b16 %v300
        %v516 = vunpack.c.l.b16 %v301
        %v517 = vunpack.c.h.b16 %v301
        %v518 = vunpack.c.l.b16 %v302
        %v519 = vunpack.c.h.b16 %v302
        %v520 = vunpack.c.l.b16 %v303
        %v521 = vunpack.c.h.b16 %v303
        %v522 = vunpack.c.l.b16 %v304
        %v523 = vunpack.c.h.b16 %v304
        %v524 = vunpack.c.l.b16 %v305
        %v525 = vunpack.c.h.b16 %v305
        %v526 = vunpack.c.l.b16 %v306
        %v527 = vunpack.c.h.b16 %v306
        %v528 = vunpack.c.l.b16 %v307
        %v529 = vunpack.c.h.b16 %v307
        %v530 = vunpack.c.l.b16 %v308
        %v531 = vunpack.c.h.b16 %v308
        %v532 = vunpack.c.l.b16 %v309
        %v533 = vunpack.c.h.b16 %v309
        %v534 = vpack.c.b16 %v408, %v406
        %v535 = vpack.c.b16 %v409, %v407
        %v536 = vpack.c.b16 %v412, %v410
        %v537 = vpack.c.b16 %v413, %v411
        %v538 = vpack.c.b16 %v416, %v414
        %v539 = vpack.c.b16 %v417, %v415
        %v540 = vpack.c.b16 %v420, %v418
        %v541 = vpack.c.b16 %v421, %v419
        %v542 = vpack.c.b16 %v424, %v422
        %v543 = vpack.c.b16 %v425, %v423
        %v544 = vpack.c.b16 %v428, %v426
        %v545 = vpack.c.b16 %v429, %v427
        %v546 = vpack.c.b16 %v432, %v430
        %v547 = vpack.c.b16 %v433, %v431
        %v548 = vpack.c.b16 %v436, %v434
        %v549 = vpack.c.b16 %v437, %v435
        %v550 = vpack.c.b16 %v440, %v438
        %v551 = vpack.c.b16 %v441, %v439
        %v552 = vpack.c.b16 %v444, %v442
        %v553 = vpack.c.b16 %v445, %v443
        %v554 = vpack.c.b16 %v448, %v446
        %v555 = vpack.c.b16 %v449, %v447
        %v556 = vpack.c.b16 %v452, %v450
        %v557 = vpack.c.b16 %v453, %v451
        %v558 = vpack.c.b16 %v456, %v454
        %v559 = vpack.c.b16 %v457, %v455
        %v560 = vpack.c.b16 %v460, %v458
        %v561 = vpack.c.b16 %v461, %v459
        %v562 = vpack.c.b16 %v464, %v462
        %v563 = vpack.c.b16 %v465, %v463
        %v564 = vpack.c.b16 %v468, %v466
        %v565 = vpack.c.b16 %v469, %v467
        %v566 = vpack.c.b16 %v472, %v470
        %v567 = vpack.c.b16 %v473, %v471
        %v568 = vpack.c.b16 %v476, %v474
        %v569 = vpack.c.b16 %v477, %v475
        %v570 = vpack.c.b16 %v480, %v478
        %v571 = vpack.c.b16 %v481, %v479
        %v572 = vpack.c.b16 %v484, %v482
        %v573 = vpack.c.b16 %v485, %v483
        %v574 = vpack.c.b16 %v488, %v486
        %v575 = vpack.c.b16 %v489, %v487
        %v576 = vpack.c.b16 %v492, %v490
        %v577 = vpack.c.b16 %v493, %v491
        %v578 = vpack.c.b16 %v496, %v494
        %v579 = vpack.c.b16 %v497, %v495
        %v580 = vpack.c.b16 %v500, %v498
        %v581 = vpack.c.b16 %v501, %v499
        %v582 = vpack.c.b16 %v504, %v502
        %v583 = vpack.c.b16 %v505, %v503
        %v584 = vpack.c.b16 %v508, %v506
        %v585 = vpack.c.b16 %v509, %v507
        %v586 = vpack.c.b16 %v512, %v510
        %v587 = vpack.c.b16 %v513, %v511
        %v588 = vpack.c.b16 %v516, %v514
        %v589 = vpack.c.b16 %v517, %v515
        %v590 = vpack.c.b16 %v520, %v518
        %v591 = vpack.c.b16 %v521, %v519
        %v592 = vpack.c.b16 %v524, %v522
        %v593 = vpack.c.b16 %v525, %v523
        %v594 = vpack.c.b16 %v528, %v526
        %v595 = vpack.c.b16 %v529, %v527
        %v596 = vpack.c.b16 %v532, %v530
        %v597 = vpack.c.b16 %v533, %v531
        %v694 = vunpack.c.l.b16 %v310
        %v695 = vunpack.c.l.b16 %v311
        %v696 = vunpack.c.l.b16 %v312
        %v697 = vunpack.c.l.b16 %v313
        %v698 = vunpack.c.l.b16 %v314
        %v699 = vunpack.c.l.b16 %v315
        %v700 = vunpack.c.l.b16 %v316
        %v701 = vunpack.c.l.b16 %v317
        %v702 = vunpack.c.l.b16 %v318
        %v703 = vunpack.c.l.b16 %v319
        %v704 = vunpack.c.l.b16 %v320
        %v705 = vunpack.c.l.b16 %v321
        %v706 = vunpack.c.l.b16 %v322
        %v707 = vunpack.c.l.b16 %v323
        %v708 = vunpack.c.l.b16 %v324
        %v709 = vunpack.c.l.b16 %v325
        %v710 = vunpack.c.l.b16 %v326
        %v711 = vunpack.c.l.b16 %v327
        %v712 = vunpack.c.l.b16 %v328
        %v713 = vunpack.c.l.b16 %v329
        %v714 = vunpack.c.l.b16 %v330
        %v715 = vunpack.c.l.b16 %v331
        %v716 = vunpack.c.l.b16 %v332
        %v717 = vunpack.c.l.b16 %v333
        %v718 = vunpack.c.l.b16 %v334
        %v719 = vunpack.c.l.b16 %v335
        %v720 = vunpack.c.l.b16 %v336
        %v721 = vunpack.c.l.b16 %v337
        %v722 = vunpack.c.l.b16 %v338
        %v723 = vunpack.c.l.b16 %v339
        %v724 = vunpack.c.l.b16 %v340
        %v725 = vunpack.c.l.b16 %v341
        %v726 = vpack.c.b16 %v695, %v694
        %v727 = vpack.c.b16 %v697, %v696
        %v728 = vpack.c.b16 %v699, %v698
        %v729 = vpack.c.b16 %v701, %v700
        %v730 = vpack.c.b16 %v703, %v702
        %v731 = vpack.c.b16 %v705, %v704
        %v732 = vpack.c.b16 %v707, %v706
        %v733 = vpack.c.b16 %v709, %v708
        %v734 = vpack.c.b16 %v711, %v710
        %v735 = vpack.c.b16 %v713, %v712
        %v736 = vpack.c.b16 %v715, %v714
        %v737 = vpack.c.b16 %v717, %v716
        %v738 = vpack.c.b16 %v719, %v718
        %v739 = vpack.c.b16 %v721, %v720
        %v740 = vpack.c.b16 %v723, %v722
        %v741 = vpack.c.b16 %v725, %v724
        %758 = vmatprep.subr.bf16.mxu0 0
        %759 = vmatpush1.bf16.msra.mxu0 %v726
        %760 = vmatprep.subr.bf16.mxu0 0
        %761 = vmatpush1.bf16.msra.mxu0 %v727
        %762 = vmatprep.subr.bf16.mxu0 0
        %763 = vmatpush1.bf16.msra.mxu0 %v728
        %764 = vmatprep.subr.bf16.mxu0 0
        %765 = vmatpush1.bf16.msra.mxu0 %v729
        %766 = vmatprep.subr.bf16.mxu0 0
        %767 = vmatpush1.bf16.msra.mxu0 %v730
        %768 = vmatprep.subr.bf16.mxu0 0
        %769 = vmatpush1.bf16.msra.mxu0 %v731
        %770 = vmatprep.subr.bf16.mxu0 0
        %771 = vmatpush1.bf16.msra.mxu0 %v732
        %772 = vmatprep.subr.bf16.mxu0 0
        %773 = vmatpush1.bf16.msra.mxu0 %v733
        %774 = vmatprep.subr.bf16.mxu0 0
        %775 = vmatpush1.bf16.msra.mxu0 %v734
        %776 = vmatprep.subr.bf16.mxu0 0
        %777 = vmatpush1.bf16.msra.mxu0 %v735
        %778 = vmatprep.subr.bf16.mxu0 0
        %779 = vmatpush1.bf16.msra.mxu0 %v736
        %780 = vmatprep.subr.bf16.mxu0 0
        %781 = vmatpush1.bf16.msra.mxu0 %v737
        %782 = vmatprep.subr.bf16.mxu0 0
        %783 = vmatpush1.bf16.msra.mxu0 %v738
        %784 = vmatprep.subr.bf16.mxu0 0
        %785 = vmatpush1.bf16.msra.mxu0 %v739
        %786 = vmatprep.subr.bf16.mxu0 0
        %787 = vmatpush1.bf16.msra.mxu0 %v740
        %788 = vmatprep.subr.bf16.mxu0 0
        %789 = vmatpush1.bf16.msra.mxu0 %v741
        %790 = vmatprep.mubr.bf16.mxu0 %v535
        %791 = vmatmul.mubr.bf16.gmra.mrb[0].mxu0 %v534
        %v792 = vpop.f32.mrb[0].mxu0
        %v793 = vadd.f32 0.0, %v792
        %v794 = vpop.f32.mrb[0].mxu0
        %v795 = vpop.f32.mrb[0].mxu0
        %v796 = vadd.f32 0.0, %v795
        %v797 = vpop.f32.mrb[0].mxu0
        %798 = vmatprep.mubr.bf16.mxu0 %v537
        %799 = vmatmul.mubr.bf16.gmra.mrb[0].mxu0 %v536
        %v800 = vpop.f32.mrb[0].mxu0
        %v801 = vadd.f32 0.0, %v800
        %v802 = vpop.f32.mrb[0].mxu0
        %v803 = vpop.f32.mrb[0].mxu0
        %v804 = vadd.f32 0.0, %v803
        %v805 = vpop.f32.mrb[0].mxu0
        %806 = vmatprep.mubr.bf16.mxu0 %v539
        %807 = vmatmul.mubr.bf16.gmra.mrb[0].mxu0 %v538
        %v808 = vpop.f32.mrb[0].mxu0
        %v809 = vadd.f32 0.0, %v808
        %v810 = vpop.f32.mrb[0].mxu0
        %v811 = vpop.f32.mrb[0].mxu0
        %v812 = vadd.f32 0.0, %v811
        %v813 = vpop.f32.mrb[0].mxu0
        %814 = vmatprep.mubr.bf16.mxu0 %v541
        %815 = vmatmul.mubr.bf16.gmra.mrb[0].mxu0 %v540
        %v816 = vpop.f32.mrb[0].mxu0
        %v817 = vadd.f32 0.0, %v816
        %v818 = vpop.f32.mrb[0].mxu0
        %v819 = vpop.f32.mrb[0].mxu0
        %v820 = vadd.f32 0.0, %v819
        %v821 = vpop.f32.mrb[0].mxu0
        %822 = vmatprep.mubr.bf16.mxu0 %v543
        %823 = vmatmul.mubr.bf16.gmra.mrb[0].mxu0 %v542
        %v824 = vpop.f32.mrb[0].mxu0
        %v825 = vadd.f32 0.0, %v824
        %v826 = vpop.f32.mrb[0].mxu0
        %v827 = vpop.f32.mrb[0].mxu0
        %v828 = vadd.f32 0.0, %v827
        %v829 = vpop.f32.mrb[0].mxu0
        %830 = vmatprep.mubr.bf16.mxu0 %v545
        %831 = vmatmul.mubr.bf16.gmra.mrb[0].mxu0 %v544
        %v832 = vpop.f32.mrb[0].mxu0
        %v833 = vadd.f32 0.0, %v832
        %v834 = vpop.f32.mrb[0].mxu0
        %v835 = vpop.f32.mrb[0].mxu0
        %v836 = vadd.f32 0.0, %v835
        %v837 = vpop.f32.mrb[0].mxu0
        %838 = vmatprep.mubr.bf16.mxu0 %v547
        %839 = vmatmul.mubr.bf16.gmra.mrb[0].mxu0 %v546
        %v840 = vpop.f32.mrb[0].mxu0
        %v841 = vadd.f32 0.0, %v840
        %v842 = vpop.f32.mrb[0].mxu0
        %v843 = vpop.f32.mrb[0].mxu0
        %v844 = vadd.f32 0.0, %v843
        %v845 = vpop.f32.mrb[0].mxu0
        %846 = vmatprep.mubr.bf16.mxu0 %v549
        %847 = vmatmul.mubr.bf16.gmra.mrb[0].mxu0 %v548
        %v848 = vpop.f32.mrb[0].mxu0
        %v849 = vadd.f32 0.0, %v848
        %v850 = vpop.f32.mrb[0].mxu0
        %v851 = vpop.f32.mrb[0].mxu0
        %v852 = vadd.f32 0.0, %v851
        %v853 = vpop.f32.mrb[0].mxu0
        %854 = vmatprep.mubr.bf16.mxu0 %v551
        %855 = vmatmul.mubr.bf16.gmra.mrb[0].mxu0 %v550
        %v856 = vpop.f32.mrb[0].mxu0
        %v857 = vadd.f32 0.0, %v856
        %v858 = vpop.f32.mrb[0].mxu0
        %v859 = vpop.f32.mrb[0].mxu0
        %v860 = vadd.f32 0.0, %v859
        %v861 = vpop.f32.mrb[0].mxu0
        %862 = vmatprep.mubr.bf16.mxu0 %v553
        %863 = vmatmul.mubr.bf16.gmra.mrb[0].mxu0 %v552
        %v864 = vpop.f32.mrb[0].mxu0
        %v865 = vadd.f32 0.0, %v864
        %v866 = vpop.f32.mrb[0].mxu0
        %v867 = vpop.f32.mrb[0].mxu0
        %v868 = vadd.f32 0.0, %v867
        %v869 = vpop.f32.mrb[0].mxu0
        %870 = vmatprep.mubr.bf16.mxu0 %v555
        %871 = vmatmul.mubr.bf16.gmra.mrb[0].mxu0 %v554
        %v872 = vpop.f32.mrb[0].mxu0
        %v873 = vadd.f32 0.0, %v872
        %v874 = vpop.f32.mrb[0].mxu0
        %v875 = vpop.f32.mrb[0].mxu0
        %v876 = vadd.f32 0.0, %v875
        %v877 = vpop.f32.mrb[0].mxu0
        %878 = vmatprep.mubr.bf16.mxu0 %v557
        %879 = vmatmul.mubr.bf16.gmra.mrb[0].mxu0 %v556
        %v880 = vpop.f32.mrb[0].mxu0
        %v881 = vadd.f32 0.0, %v880
        %v882 = vpop.f32.mrb[0].mxu0
        %v883 = vpop.f32.mrb[0].mxu0
        %v884 = vadd.f32 0.0, %v883
        %v885 = vpop.f32.mrb[0].mxu0
        %886 = vmatprep.mubr.bf16.mxu0 %v559
        %887 = vmatmul.mubr.bf16.gmra.mrb[0].mxu0 %v558
        %v888 = vpop.f32.mrb[0].mxu0
        %v889 = vadd.f32 0.0, %v888
        %v890 = vpop.f32.mrb[0].mxu0
        %v891 = vpop.f32.mrb[0].mxu0
        %v892 = vadd.f32 0.0, %v891
        %v893 = vpop.f32.mrb[0].mxu0
        %894 = vmatprep.mubr.bf16.mxu0 %v561
        %895 = vmatmul.mubr.bf16.gmra.mrb[0].mxu0 %v560
        %v896 = vpop.f32.mrb[0].mxu0
        %v897 = vadd.f32 0.0, %v896
        %v898 = vpop.f32.mrb[0].mxu0
        %v899 = vpop.f32.mrb[0].mxu0
        %v900 = vadd.f32 0.0, %v899
        %v901 = vpop.f32.mrb[0].mxu0
        %902 = vmatprep.mubr.bf16.mxu0 %v563
        %903 = vmatmul.mubr.bf16.gmra.mrb[0].mxu0 %v562
        %v904 = vpop.f32.mrb[0].mxu0
        %v905 = vadd.f32 0.0, %v904
        %v906 = vpop.f32.mrb[0].mxu0
        %v907 = vpop.f32.mrb[0].mxu0
        %v908 = vadd.f32 0.0, %v907
        %v909 = vpop.f32.mrb[0].mxu0
        %910 = vmatprep.mubr.bf16.mxu0 %v565
        %911 = vmatmul.mubr.bf16.gmra.mrb[0].mxu0 %v564
        %v912 = vpop.f32.mrb[0].mxu0
        %v913 = vadd.f32 0.0, %v912
        %v914 = vpop.f32.mrb[0].mxu0
        %v915 = vpop.f32.mrb[0].mxu0
        %v916 = vadd.f32 0.0, %v915
        %v917 = vpop.f32.mrb[0].mxu0
        %918 = vmatprep.mubr.bf16.mxu0 %v567
        %919 = vmatmul.mubr.bf16.gmra.mrb[0].mxu0 %v566
        %v920 = vpop.f32.mrb[0].mxu0
        %v921 = vadd.f32 0.0, %v920
        %v922 = vpop.f32.mrb[0].mxu0
        %v923 = vpop.f32.mrb[0].mxu0
        %v924 = vadd.f32 0.0, %v923
        %v925 = vpop.f32.mrb[0].mxu0
        %926 = vmatprep.mubr.bf16.mxu0 %v569
        %927 = vmatmul.mubr.bf16.gmra.mrb[0].mxu0 %v568
        %v928 = vpop.f32.mrb[0].mxu0
        %v929 = vadd.f32 0.0, %v928
        %v930 = vpop.f32.mrb[0].mxu0
        %v931 = vpop.f32.mrb[0].mxu0
        %v932 = vadd.f32 0.0, %v931
        %v933 = vpop.f32.mrb[0].mxu0
        %934 = vmatprep.mubr.bf16.mxu0 %v571
        %935 = vmatmul.mubr.bf16.gmra.mrb[0].mxu0 %v570
        %v936 = vpop.f32.mrb[0].mxu0
        %v937 = vadd.f32 0.0, %v936
        %v938 = vpop.f32.mrb[0].mxu0
        %v939 = vpop.f32.mrb[0].mxu0
        %v940 = vadd.f32 0.0, %v939
        %v941 = vpop.f32.mrb[0].mxu0
        %942 = vmatprep.mubr.bf16.mxu0 %v573
        %943 = vmatmul.mubr.bf16.gmra.mrb[0].mxu0 %v572
        %v944 = vpop.f32.mrb[0].mxu0
        %v945 = vadd.f32 0.0, %v944
        %v946 = vpop.f32.mrb[0].mxu0
        %v947 = vpop.f32.mrb[0].mxu0
        %v948 = vadd.f32 0.0, %v947
        %v949 = vpop.f32.mrb[0].mxu0
        %950 = vmatprep.mubr.bf16.mxu0 %v575
        %951 = vmatmul.mubr.bf16.gmra.mrb[0].mxu0 %v574
        %v952 = vpop.f32.mrb[0].mxu0
        %v953 = vadd.f32 0.0, %v952
        %v954 = vpop.f32.mrb[0].mxu0
        %v955 = vpop.f32.mrb[0].mxu0
        %v956 = vadd.f32 0.0, %v955
        %v957 = vpop.f32.mrb[0].mxu0
        %958 = vmatprep.mubr.bf16.mxu0 %v577
        %959 = vmatmul.mubr.bf16.gmra.mrb[0].mxu0 %v576
        %v960 = vpop.f32.mrb[0].mxu0
        %v961 = vadd.f32 0.0, %v960
        %v962 = vpop.f32.mrb[0].mxu0
        %v963 = vpop.f32.mrb[0].mxu0
        %v964 = vadd.f32 0.0, %v963
        %v965 = vpop.f32.mrb[0].mxu0
        %966 = vmatprep.mubr.bf16.mxu0 %v579
        %967 = vmatmul.mubr.bf16.gmra.mrb[0].mxu0 %v578
        %v968 = vpop.f32.mrb[0].mxu0
        %v969 = vadd.f32 0.0, %v968
        %v970 = vpop.f32.mrb[0].mxu0
        %v971 = vpop.f32.mrb[0].mxu0
        %v972 = vadd.f32 0.0, %v971
        %v973 = vpop.f32.mrb[0].mxu0
        %974 = vmatprep.mubr.bf16.mxu0 %v581
        %975 = vmatmul.mubr.bf16.gmra.mrb[0].mxu0 %v580
        %v976 = vpop.f32.mrb[0].mxu0
        %v977 = vadd.f32 0.0, %v976
        %v978 = vpop.f32.mrb[0].mxu0
        %v979 = vpop.f32.mrb[0].mxu0
        %v980 = vadd.f32 0.0, %v979
        %v981 = vpop.f32.mrb[0].mxu0
        %982 = vmatprep.mubr.bf16.mxu0 %v583
        %983 = vmatmul.mubr.bf16.gmra.mrb[0].mxu0 %v582
        %v984 = vpop.f32.mrb[0].mxu0
        %v985 = vadd.f32 0.0, %v984
        %v986 = vpop.f32.mrb[0].mxu0
        %v987 = vpop.f32.mrb[0].mxu0
        %v988 = vadd.f32 0.0, %v987
        %v989 = vpop.f32.mrb[0].mxu0
        %990 = vmatprep.mubr.bf16.mxu0 %v585
        %991 = vmatmul.mubr.bf16.gmra.mrb[0].mxu0 %v584
        %v992 = vpop.f32.mrb[0].mxu0
        %v993 = vadd.f32 0.0, %v992
        %v994 = vpop.f32.mrb[0].mxu0
        %v995 = vpop.f32.mrb[0].mxu0
        %v996 = vadd.f32 0.0, %v995
        %v997 = vpop.f32.mrb[0].mxu0
        %998 = vmatprep.mubr.bf16.mxu0 %v587
        %999 = vmatmul.mubr.bf16.gmra.mrb[0].mxu0 %v586
        %v1000 = vpop.f32.mrb[0].mxu0
        %v1001 = vadd.f32 0.0, %v1000
        %v1002 = vpop.f32.mrb[0].mxu0
        %v1003 = vpop.f32.mrb[0].mxu0
        %v1004 = vadd.f32 0.0, %v1003
        %v1005 = vpop.f32.mrb[0].mxu0
        %1006 = vmatprep.mubr.bf16.mxu0 %v589
        %1007 = vmatmul.mubr.bf16.gmra.mrb[0].mxu0 %v588
        %v1008 = vpop.f32.mrb[0].mxu0
        %v1009 = vadd.f32 0.0, %v1008
        %v1010 = vpop.f32.mrb[0].mxu0
        %v1011 = vpop.f32.mrb[0].mxu0
        %v1012 = vadd.f32 0.0, %v1011
        %v1013 = vpop.f32.mrb[0].mxu0
        %1014 = vmatprep.mubr.bf16.mxu0 %v591
        %1015 = vmatmul.mubr.bf16.gmra.mrb[0].mxu0 %v590
        %v1016 = vpop.f32.mrb[0].mxu0
        %v1017 = vadd.f32 0.0, %v1016
        %v1018 = vpop.f32.mrb[0].mxu0
        %v1019 = vpop.f32.mrb[0].mxu0
        %v1020 = vadd.f32 0.0, %v1019
        %v1021 = vpop.f32.mrb[0].mxu0
        %1022 = vmatprep.mubr.bf16.mxu0 %v593
        %1023 = vmatmul.mubr.bf16.gmra.mrb[0].mxu0 %v592
        %v1024 = vpop.f32.mrb[0].mxu0
        %v1025 = vadd.f32 0.0, %v1024
        %v1026 = vpop.f32.mrb[0].mxu0
        %v1027 = vpop.f32.mrb[0].mxu0
        %v1028 = vadd.f32 0.0, %v1027
        %v1029 = vpop.f32.mrb[0].mxu0
        %1030 = vmatprep.mubr.bf16.mxu0 %v595
        %1031 = vmatmul.mubr.bf16.gmra.mrb[0].mxu0 %v594
        %v1032 = vpop.f32.mrb[0].mxu0
        %v1033 = vadd.f32 0.0, %v1032
        %v1034 = vpop.f32.mrb[0].mxu0
        %v1035 = vpop.f32.mrb[0].mxu0
        %v1036 = vadd.f32 0.0, %v1035
        %v1037 = vpop.f32.mrb[0].mxu0
        %1038 = vmatprep.mubr.bf16.mxu0 %v597
        %1039 = vmatmul.mubr.bf16.gmra.mrb[0].mxu0 %v596
        %v1040 = vpop.f32.mrb[0].mxu0
        %v1041 = vadd.f32 0.0, %v1040
        %v1042 = vpop.f32.mrb[0].mxu0
        %v1043 = vpop.f32.mrb[0].mxu0
        %v1044 = vadd.f32 0.0, %v1043
        %v1045 = vpop.f32.mrb[0].mxu0
        %1046 = vdwg.mxu0
        %v1047 = vld [vmem:[#allocation3] sm:$0x1]
        %v1048 = vadd.f32 %v793, %v796
        %v1049 = vadd.f32 %v1048, %v801
        %v1050 = vadd.f32 %v1049, %v804
        %v1051 = vadd.f32 %v1050, %v809
        %v1052 = vadd.f32 %v1051, %v812
        %v1053 = vadd.f32 %v1052, %v817
        %v1054 = vadd.f32 %v1053, %v820
        %v1055 = vadd.f32 %v1054, %v825
        %v1056 = vadd.f32 %v1055, %v828
        %v1057 = vadd.f32 %v1056, %v833
        %v1058 = vadd.f32 %v1057, %v836
        %v1059 = vadd.f32 %v1058, %v841
        %v1060 = vadd.f32 %v1059, %v844
        %v1061 = vadd.f32 %v1060, %v849
        %v1062 = vadd.f32 %v1061, %v852
        %v1063 = vadd.f32 %v1062, %v857
        %v1064 = vadd.f32 %v1063, %v860
        %v1065 = vadd.f32 %v1064, %v865
        %v1066 = vadd.f32 %v1065, %v868
        %v1067 = vadd.f32 %v1066, %v873
        %v1068 = vadd.f32 %v1067, %v876
        %v1069 = vadd.f32 %v1068, %v881
        %v1070 = vadd.f32 %v1069, %v884
        %v1071 = vadd.f32 %v1070, %v889
        %v1072 = vadd.f32 %v1071, %v892
        %v1073 = vadd.f32 %v1072, %v897
        %v1074 = vadd.f32 %v1073, %v900
        %v1075 = vadd.f32 %v1074, %v905
        %v1076 = vadd.f32 %v1075, %v908
        %v1077 = vadd.f32 %v1076, %v913
        %v1078 = vadd.f32 %v1077, %v916
        %v1079 = vadd.f32 %v1078, %v921
        %v1080 = vadd.f32 %v1079, %v924
        %v1081 = vadd.f32 %v1080, %v929
        %v1082 = vadd.f32 %v1081, %v932
        %v1083 = vadd.f32 %v1082, %v937
        %v1084 = vadd.f32 %v1083, %v940
        %v1085 = vadd.f32 %v1084, %v945
        %v1086 = vadd.f32 %v1085, %v948
        %v1087 = vadd.f32 %v1086, %v953
        %v1088 = vadd.f32 %v1087, %v956
        %v1089 = vadd.f32 %v1088, %v961
        %v1090 = vadd.f32 %v1089, %v964
        %v1091 = vadd.f32 %v1090, %v969
        %v1092 = vadd.f32 %v1091, %v972
        %v1093 = vadd.f32 %v1092, %v977
        %v1094 = vadd.f32 %v1093, %v980
        %v1095 = vadd.f32 %v1094, %v985
        %v1096 = vadd.f32 %v1095, %v988
        %v1097 = vadd.f32 %v1096, %v993
        %v1098 = vadd.f32 %v1097, %v996
        %v1099 = vadd.f32 %v1098, %v1001
        %v1100 = vadd.f32 %v1099, %v1004
        %v1101 = vadd.f32 %v1100, %v1009
        %v1102 = vadd.f32 %v1101, %v1012
        %v1103 = vadd.f32 %v1102, %v1017
        %v1104 = vadd.f32 %v1103, %v1020
        %v1105 = vadd.f32 %v1104, %v1025
        %v1106 = vadd.f32 %v1105, %v1028
        %v1107 = vadd.f32 %v1106, %v1033
        %v1108 = vadd.f32 %v1107, %v1036
        %v1109 = vadd.f32 %v1108, %v1041
        %v1110 = vadd.f32 %v1109, %v1044
        %v1111 = vrot.slane %v1110, 4
        %v1112 = vadd.f32 %v1110, %v1111
        %v1113 = vrot.slane %v1112, 2
        %v1114 = vadd.f32 %v1112, %v1113
        %v1115 = vrot.slane %v1114, 1
        %v1116 = vadd.f32 %v1114, %v1115
        %v1117 = vadd.f32 %v1047, %v1116
        %1118 = vst [vmem:[#allocation3] sm:$0x1] %v1117
        %v1119 = vld [vmem:[#allocation4] sm:$0x1]
        %v1120 = vmul.f32 %v793, %v793
        %v1121 = vmul.f32 %v796, %v796
        %v1122 = vmul.f32 %v801, %v801
        %v1123 = vmul.f32 %v804, %v804
        %v1124 = vmul.f32 %v809, %v809
        %v1125 = vmul.f32 %v812, %v812
        %v1126 = vmul.f32 %v817, %v817
        %v1127 = vmul.f32 %v820, %v820
        %v1128 = vmul.f32 %v825, %v825
        %v1129 = vmul.f32 %v828, %v828
        %v1130 = vmul.f32 %v833, %v833
        %v1131 = vmul.f32 %v836, %v836
        %v1132 = vmul.f32 %v841, %v841
        %v1133 = vmul.f32 %v844, %v844
        %v1134 = vmul.f32 %v849, %v849
        %v1135 = vmul.f32 %v852, %v852
        %v1136 = vmul.f32 %v857, %v857
        %v1137 = vmul.f32 %v860, %v860
        %v1138 = vmul.f32 %v865, %v865
        %v1139 = vmul.f32 %v868, %v868
        %v1140 = vmul.f32 %v873, %v873
        %v1141 = vmul.f32 %v876, %v876
        %v1142 = vmul.f32 %v881, %v881
        %v1143 = vmul.f32 %v884, %v884
        %v1144 = vmul.f32 %v889, %v889
        %v1145 = vmul.f32 %v892, %v892
        %v1146 = vmul.f32 %v897, %v897
        %v1147 = vmul.f32 %v900, %v900
        %v1148 = vmul.f32 %v905, %v905
        %v1149 = vmul.f32 %v908, %v908
        %v1150 = vmul.f32 %v913, %v913
        %v1151 = vmul.f32 %v916, %v916
        %v1152 = vmul.f32 %v921, %v921
        %v1153 = vmul.f32 %v924, %v924
        %v1154 = vmul.f32 %v929, %v929
        %v1155 = vmul.f32 %v932, %v932
        %v1156 = vmul.f32 %v937, %v937
        %v1157 = vmul.f32 %v940, %v940
        %v1158 = vmul.f32 %v945, %v945
        %v1159 = vmul.f32 %v948, %v948
        %v1160 = vmul.f32 %v953, %v953
        %v1161 = vmul.f32 %v956, %v956
        %v1162 = vmul.f32 %v961, %v961
        %v1163 = vmul.f32 %v964, %v964
        %v1164 = vmul.f32 %v969, %v969
        %v1165 = vmul.f32 %v972, %v972
        %v1166 = vmul.f32 %v977, %v977
        %v1167 = vmul.f32 %v980, %v980
        %v1168 = vmul.f32 %v985, %v985
        %v1169 = vmul.f32 %v988, %v988
        %v1170 = vmul.f32 %v993, %v993
        %v1171 = vmul.f32 %v996, %v996
        %v1172 = vmul.f32 %v1001, %v1001
        %v1173 = vmul.f32 %v1004, %v1004
        %v1174 = vmul.f32 %v1009, %v1009
        %v1175 = vmul.f32 %v1012, %v1012
        %v1176 = vmul.f32 %v1017, %v1017
        %v1177 = vmul.f32 %v1020, %v1020
        %v1178 = vmul.f32 %v1025, %v1025
        %v1179 = vmul.f32 %v1028, %v1028
        %v1180 = vmul.f32 %v1033, %v1033
        %v1181 = vmul.f32 %v1036, %v1036
        %v1182 = vmul.f32 %v1041, %v1041
        %v1183 = vmul.f32 %v1044, %v1044
        %v1184 = vadd.f32 %v1120, %v1121
        %v1185 = vadd.f32 %v1184, %v1122
        %v1186 = vadd.f32 %v1185, %v1123
        %v1187 = vadd.f32 %v1186, %v1124
        %v1188 = vadd.f32 %v1187, %v1125
        %v1189 = vadd.f32 %v1188, %v1126
        %v1190 = vadd.f32 %v1189, %v1127
        %v1191 = vadd.f32 %v1190, %v1128
        %v1192 = vadd.f32 %v1191, %v1129
        %v1193 = vadd.f32 %v1192, %v1130
        %v1194 = vadd.f32 %v1193, %v1131
        %v1195 = vadd.f32 %v1194, %v1132
        %v1196 = vadd.f32 %v1195, %v1133
        %v1197 = vadd.f32 %v1196, %v1134
        %v1198 = vadd.f32 %v1197, %v1135
        %v1199 = vadd.f32 %v1198, %v1136
        %v1200 = vadd.f32 %v1199, %v1137
        %v1201 = vadd.f32 %v1200, %v1138
        %v1202 = vadd.f32 %v1201, %v1139
        %v1203 = vadd.f32 %v1202, %v1140
        %v1204 = vadd.f32 %v1203, %v1141
        %v1205 = vadd.f32 %v1204, %v1142
        %v1206 = vadd.f32 %v1205, %v1143
        %v1207 = vadd.f32 %v1206, %v1144
        %v1208 = vadd.f32 %v1207, %v1145
        %v1209 = vadd.f32 %v1208, %v1146
        %v1210 = vadd.f32 %v1209, %v1147
        %v1211 = vadd.f32 %v1210, %v1148
        %v1212 = vadd.f32 %v1211, %v1149
        %v1213 = vadd.f32 %v1212, %v1150
        %v1214 = vadd.f32 %v1213, %v1151
        %v1215 = vadd.f32 %v1214, %v1152
        %v1216 = vadd.f32 %v1215, %v1153
        %v1217 = vadd.f32 %v1216, %v1154
        %v1218 = vadd.f32 %v1217, %v1155
        %v1219 = vadd.f32 %v1218, %v1156
        %v1220 = vadd.f32 %v1219, %v1157
        %v1221 = vadd.f32 %v1220, %v1158
        %v1222 = vadd.f32 %v1221, %v1159
        %v1223 = vadd.f32 %v1222, %v1160
        %v1224 = vadd.f32 %v1223, %v1161
        %v1225 = vadd.f32 %v1224, %v1162
        %v1226 = vadd.f32 %v1225, %v1163
        %v1227 = vadd.f32 %v1226, %v1164
        %v1228 = vadd.f32 %v1227, %v1165
        %v1229 = vadd.f32 %v1228, %v1166
        %v1230 = vadd.f32 %v1229, %v1167
        %v1231 = vadd.f32 %v1230, %v1168
        %v1232 = vadd.f32 %v1231, %v1169
        %v1233 = vadd.f32 %v1232, %v1170
        %v1234 = vadd.f32 %v1233, %v1171
        %v1235 = vadd.f32 %v1234, %v1172
        %v1236 = vadd.f32 %v1235, %v1173
        %v1237 = vadd.f32 %v1236, %v1174
        %v1238 = vadd.f32 %v1237, %v1175
        %v1239 = vadd.f32 %v1238, %v1176
        %v1240 = vadd.f32 %v1239, %v1177
        %v1241 = vadd.f32 %v1240, %v1178
        %v1242 = vadd.f32 %v1241, %v1179
        %v1243 = vadd.f32 %v1242, %v1180
        %v1244 = vadd.f32 %v1243, %v1181
        %v1245 = vadd.f32 %v1244, %v1182
        %v1246 = vadd.f32 %v1245, %v1183
        %v1247 = vrot.slane %v1246, 4
        %v1248 = vadd.f32 %v1246, %v1247
        %v1249 = vrot.slane %v1248, 2
        %v1250 = vadd.f32 %v1248, %v1249
        %v1251 = vrot.slane %v1250, 1
        %v1252 = vadd.f32 %v1250, %v1251
        %v1253 = vadd.f32 %v1119, %v1252
        %1254 = vst [vmem:[#allocation4] sm:$0x1] %v1253
        %s1255 = smul.u32 %s20, 512
        %s1256 = scalar_lea.vmem [#allocation2], %s1255
        %1257 = vst [vmem:[%s1256] sm:$0xff] %v793
        %1258 = vst [vmem:[%s1256 + $0x8] sm:$0xff] %v796
        %1259 = vst [vmem:[%s1256 + $0x10] sm:$0xff] %v801
        %1260 = vst [vmem:[%s1256 + $0x18] sm:$0xff] %v804
        %1261 = vst [vmem:[%s1256 + $0x20] sm:$0xff] %v809
        %1262 = vst [vmem:[%s1256 + $0x28] sm:$0xff] %v812
        %1263 = vst [vmem:[%s1256 + $0x30] sm:$0xff] %v817
        %1264 = vst [vmem:[%s1256 + $0x38] sm:$0xff] %v820
        %1265 = vst [vmem:[%s1256 + $0x40] sm:$0xff] %v825
        %1266 = vst [vmem:[%s1256 + $0x48] sm:$0xff] %v828
        %1267 = vst [vmem:[%s1256 + $0x50] sm:$0xff] %v833
        %1268 = vst [vmem:[%s1256 + $0x58] sm:$0xff] %v836
        %1269 = vst [vmem:[%s1256 + $0x60] sm:$0xff] %v841
        %1270 = vst [vmem:[%s1256 + $0x68] sm:$0xff] %v844
        %1271 = vst [vmem:[%s1256 + $0x70] sm:$0xff] %v849
        %1272 = vst [vmem:[%s1256 + $0x78] sm:$0xff] %v852
        %1273 = vst [vmem:[%s1256 + $0x80] sm:$0xff] %v857
        %1274 = vst [vmem:[%s1256 + $0x88] sm:$0xff] %v860
        %1275 = vst [vmem:[%s1256 + $0x90] sm:$0xff] %v865
        %1276 = vst [vmem:[%s1256 + $0x98] sm:$0xff] %v868
        %1277 = vst [vmem:[%s1256 + $0xa0] sm:$0xff] %v873
        %1278 = vst [vmem:[%s1256 + $0xa8] sm:$0xff] %v876
        %1279 = vst [vmem:[%s1256 + $0xb0] sm:$0xff] %v881
        %1280 = vst [vmem:[%s1256 + $0xb8] sm:$0xff] %v884
        %1281 = vst [vmem:[%s1256 + $0xc0] sm:$0xff] %v889
        %1282 = vst [vmem:[%s1256 + $0xc8] sm:$0xff] %v892
        %1283 = vst [vmem:[%s1256 + $0xd0] sm:$0xff] %v897
        %1284 = vst [vmem:[%s1256 + $0xd8] sm:$0xff] %v900
        %1285 = vst [vmem:[%s1256 + $0xe0] sm:$0xff] %v905
        %1286 = vst [vmem:[%s1256 + $0xe8] sm:$0xff] %v908
        %1287 = vst [vmem:[%s1256 + $0xf0] sm:$0xff] %v913
        %1288 = vst [vmem:[%s1256 + $0xf8] sm:$0xff] %v916
        %1289 = vst [vmem:[%s1256 + $0x100] sm:$0xff] %v921
        %1290 = vst [vmem:[%s1256 + $0x108] sm:$0xff] %v924
        %1291 = vst [vmem:[%s1256 + $0x110] sm:$0xff] %v929
        %1292 = vst [vmem:[%s1256 + $0x118] sm:$0xff] %v932
        %1293 = vst [vmem:[%s1256 + $0x120] sm:$0xff] %v937
        %1294 = vst [vmem:[%s1256 + $0x128] sm:$0xff] %v940
        %1295 = vst [vmem:[%s1256 + $0x130] sm:$0xff] %v945
        %1296 = vst [vmem:[%s1256 + $0x138] sm:$0xff] %v948
        %1297 = vst [vmem:[%s1256 + $0x140] sm:$0xff] %v953
        %1298 = vst [vmem:[%s1256 + $0x148] sm:$0xff] %v956
        %1299 = vst [vmem:[%s1256 + $0x150] sm:$0xff] %v961
        %1300 = vst [vmem:[%s1256 + $0x158] sm:$0xff] %v964
        %1301 = vst [vmem:[%s1256 + $0x160] sm:$0xff] %v969
        %1302 = vst [vmem:[%s1256 + $0x168] sm:$0xff] %v972
        %1303 = vst [vmem:[%s1256 + $0x170] sm:$0xff] %v977
        %1304 = vst [vmem:[%s1256 + $0x178] sm:$0xff] %v980
        %1305 = vst [vmem:[%s1256 + $0x180] sm:$0xff] %v985
        %1306 = vst [vmem:[%s1256 + $0x188] sm:$0xff] %v988
        %1307 = vst [vmem:[%s1256 + $0x190] sm:$0xff] %v993
        %1308 = vst [vmem:[%s1256 + $0x198] sm:$0xff] %v996
        %1309 = vst [vmem:[%s1256 + $0x1a0] sm:$0xff] %v1001
        %1310 = vst [vmem:[%s1256 + $0x1a8] sm:$0xff] %v1004
        %1311 = vst [vmem:[%s1256 + $0x1b0] sm:$0xff] %v1009
        %1312 = vst [vmem:[%s1256 + $0x1b8] sm:$0xff] %v1012
        %1313 = vst [vmem:[%s1256 + $0x1c0] sm:$0xff] %v1017
        %1314 = vst [vmem:[%s1256 + $0x1c8] sm:$0xff] %v1020
        %1315 = vst [vmem:[%s1256 + $0x1d0] sm:$0xff] %v1025
        %1316 = vst [vmem:[%s1256 + $0x1d8] sm:$0xff] %v1028
        %1317 = vst [vmem:[%s1256 + $0x1e0] sm:$0xff] %v1033
        %1318 = vst [vmem:[%s1256 + $0x1e8] sm:$0xff] %v1036
        %1319 = vst [vmem:[%s1256 + $0x1f0] sm:$0xff] %v1041
        %1320 = vst [vmem:[%s1256 + $0x1f8] sm:$0xff] %v1044
      $region40: #{encoder3d_forward.1} parent=35 // pred_fallthru
        _
      %p1321 = scmp.eq.s32.totalorder %s19, 1
      // Predicated region
      $region45: #{encoder3d_forward.1} parent=35 // pred_check
        %p1322 = pneg %p1321
      $region46: #{encoder3d_forward.1} parent=35 // pred_check_branch
        %1324 = sbr.rel (%p1322) target = $region48
      $region47: #{encoder3d_forward.1} parent=35 // pred_region
        %p1325 = scmp.eq.s32.totalorder %s20, 0
        // Predicated region
        $region49: #{encoder3d_forward.1} parent=47 // pred_check
          %p1326 = pneg %p1325
        $region50: #{encoder3d_forward.1} parent=47 // pred_check_branch
          %1328 = sbr.rel (%p1326) target = $region52
        $region51: #{encoder3d_forward.1} parent=47 // pred_region
          %v1329 = vld [vmem:[#allocation3] sm:$0x1]
          %v1330 = vrcp.pop 1024.0
          %v1331 = vmul.f32 %v1329, %v1330
          %v1332 = vld [vmem:[#allocation4] sm:$0x1]
          %v1333 = vmul.f32 %v1332, %v1330
          %v1334 = vmul.f32 %v1331, %v1331
          %v1335 = vsub.f32 %v1333, %v1334
          %v1336 = vmax.f32 %v1335, 0.0
          %v1337 = vld [vmem:[%s2] sm:$0x1]
          %v1338 = vadd.f32 %v1336, 1e-05
          %v1339 = vrsqrt.pop %v1338
          %v1340 = vmul.f32 %v1337, %v1339
          %1341 = vst [vmem:[#allocation5] sm:$0x1] %v1340
          %v1342 = vld [vmem:[%s3] sm:$0x1]
          %v1343 = vmul.f32 %v1331, %v1340
          %v1344 = vsub.f32 %v1342, %v1343
          %1345 = vst [vmem:[#allocation6] sm:$0x1] %v1344
        $region52: #{encoder3d_forward.1} parent=47 // pred_fallthru
          _
        %s1346 = smul.u32 %s20, 512
        %s1347 = scalar_lea.vmem [#allocation2], %s1346
        %v1348 = vld [vmem:[%s1347] sm:$0xff]
        %v1349 = vld [vmem:[%s1347 + $0x8] sm:$0xff]
        %v1350 = vld [vmem:[%s1347 + $0x10] sm:$0xff]
        %v1351 = vld [vmem:[%s1347 + $0x18] sm:$0xff]
        %v1352 = vld [vmem:[%s1347 + $0x20] sm:$0xff]
        %v1353 = vld [vmem:[%s1347 + $0x28] sm:$0xff]
        %v1354 = vld [vmem:[%s1347 + $0x30] sm:$0xff]
        %v1355 = vld [vmem:[%s1347 + $0x38] sm:$0xff]
        %v1356 = vld [vmem:[%s1347 + $0x40] sm:$0xff]
        %v1357 = vld [vmem:[%s1347 + $0x48] sm:$0xff]
        %v1358 = vld [vmem:[%s1347 + $0x50] sm:$0xff]
        %v1359 = vld [vmem:[%s1347 + $0x58] sm:$0xff]
        %v1360 = vld [vmem:[%s1347 + $0x60] sm:$0xff]
        %v1361 = vld [vmem:[%s1347 + $0x68] sm:$0xff]
        %v1362 = vld [vmem:[%s1347 + $0x70] sm:$0xff]
        %v1363 = vld [vmem:[%s1347 + $0x78] sm:$0xff]
        %v1364 = vld [vmem:[%s1347 + $0x80] sm:$0xff]
        %v1365 = vld [vmem:[%s1347 + $0x88] sm:$0xff]
        %v1366 = vld [vmem:[%s1347 + $0x90] sm:$0xff]
        %v1367 = vld [vmem:[%s1347 + $0x98] sm:$0xff]
        %v1368 = vld [vmem:[%s1347 + $0xa0] sm:$0xff]
        %v1369 = vld [vmem:[%s1347 + $0xa8] sm:$0xff]
        %v1370 = vld [vmem:[%s1347 + $0xb0] sm:$0xff]
        %v1371 = vld [vmem:[%s1347 + $0xb8] sm:$0xff]
        %v1372 = vld [vmem:[%s1347 + $0xc0] sm:$0xff]
        %v1373 = vld [vmem:[%s1347 + $0xc8] sm:$0xff]
        %v1374 = vld [vmem:[%s1347 + $0xd0] sm:$0xff]
        %v1375 = vld [vmem:[%s1347 + $0xd8] sm:$0xff]
        %v1376 = vld [vmem:[%s1347 + $0xe0] sm:$0xff]
        %v1377 = vld [vmem:[%s1347 + $0xe8] sm:$0xff]
        %v1378 = vld [vmem:[%s1347 + $0xf0] sm:$0xff]
        %v1379 = vld [vmem:[%s1347 + $0xf8] sm:$0xff]
        %v1380 = vld [vmem:[%s1347 + $0x100] sm:$0xff]
        %v1381 = vld [vmem:[%s1347 + $0x108] sm:$0xff]
        %v1382 = vld [vmem:[%s1347 + $0x110] sm:$0xff]
        %v1383 = vld [vmem:[%s1347 + $0x118] sm:$0xff]
        %v1384 = vld [vmem:[%s1347 + $0x120] sm:$0xff]
        %v1385 = vld [vmem:[%s1347 + $0x128] sm:$0xff]
        %v1386 = vld [vmem:[%s1347 + $0x130] sm:$0xff]
        %v1387 = vld [vmem:[%s1347 + $0x138] sm:$0xff]
        %v1388 = vld [vmem:[%s1347 + $0x140] sm:$0xff]
        %v1389 = vld [vmem:[%s1347 + $0x148] sm:$0xff]
        %v1390 = vld [vmem:[%s1347 + $0x150] sm:$0xff]
        %v1391 = vld [vmem:[%s1347 + $0x158] sm:$0xff]
        %v1392 = vld [vmem:[%s1347 + $0x160] sm:$0xff]
        %v1393 = vld [vmem:[%s1347 + $0x168] sm:$0xff]
        %v1394 = vld [vmem:[%s1347 + $0x170] sm:$0xff]
        %v1395 = vld [vmem:[%s1347 + $0x178] sm:$0xff]
        %v1396 = vld [vmem:[%s1347 + $0x180] sm:$0xff]
        %v1397 = vld [vmem:[%s1347 + $0x188] sm:$0xff]
        %v1398 = vld [vmem:[%s1347 + $0x190] sm:$0xff]
        %v1399 = vld [vmem:[%s1347 + $0x198] sm:$0xff]
        %v1400 = vld [vmem:[%s1347 + $0x1a0] sm:$0xff]
        %v1401 = vld [vmem:[%s1347 + $0x1a8] sm:$0xff]
        %v1402 = vld [vmem:[%s1347 + $0x1b0] sm:$0xff]
        %v1403 = vld [vmem:[%s1347 + $0x1b8] sm:$0xff]
        %v1404 = vld [vmem:[%s1347 + $0x1c0] sm:$0xff]
        %v1405 = vld [vmem:[%s1347 + $0x1c8] sm:$0xff]
        %v1406 = vld [vmem:[%s1347 + $0x1d0] sm:$0xff]
        %v1407 = vld [vmem:[%s1347 + $0x1d8] sm:$0xff]
        %v1408 = vld [vmem:[%s1347 + $0x1e0] sm:$0xff]
        %v1409 = vld [vmem:[%s1347 + $0x1e8] sm:$0xff]
        %v1410 = vld [vmem:[%s1347 + $0x1f0] sm:$0xff]
        %v1411 = vld [vmem:[%s1347 + $0x1f8] sm:$0xff]
        %v1412 = vld [vmem:[#allocation5] sm:$0x1]
        %v1414 = vlaneseq
        %v1415 = vshrl.u32 %v1414, 7
        %v1416 = vsub.s32 0, %v1415
        %v1417 = vrot.slane %v1412, %v1416
        %v1419 = vmul.f32 %v1348, %v1417
        %v1420 = vmul.f32 %v1349, %v1417
        %v1421 = vmul.f32 %v1350, %v1417
        %v1422 = vmul.f32 %v1351, %v1417
        %v1423 = vmul.f32 %v1352, %v1417
        %v1424 = vmul.f32 %v1353, %v1417
        %v1425 = vmul.f32 %v1354, %v1417
        %v1426 = vmul.f32 %v1355, %v1417
        %v1427 = vmul.f32 %v1356, %v1417
        %v1428 = vmul.f32 %v1357, %v1417
        %v1429 = vmul.f32 %v1358, %v1417
        %v1430 = vmul.f32 %v1359, %v1417
        %v1431 = vmul.f32 %v1360, %v1417
        %v1432 = vmul.f32 %v1361, %v1417
        %v1433 = vmul.f32 %v1362, %v1417
        %v1434 = vmul.f32 %v1363, %v1417
        %v1435 = vmul.f32 %v1364, %v1417
        %v1436 = vmul.f32 %v1365, %v1417
        %v1437 = vmul.f32 %v1366, %v1417
        %v1438 = vmul.f32 %v1367, %v1417
        %v1439 = vmul.f32 %v1368, %v1417
        %v1440 = vmul.f32 %v1369, %v1417
        %v1441 = vmul.f32 %v1370, %v1417
        %v1442 = vmul.f32 %v1371, %v1417
        %v1443 = vmul.f32 %v1372, %v1417
        %v1444 = vmul.f32 %v1373, %v1417
        %v1445 = vmul.f32 %v1374, %v1417
        %v1446 = vmul.f32 %v1375, %v1417
        %v1447 = vmul.f32 %v1376, %v1417
        %v1448 = vmul.f32 %v1377, %v1417
        %v1449 = vmul.f32 %v1378, %v1417
        %v1450 = vmul.f32 %v1379, %v1417
        %v1451 = vmul.f32 %v1380, %v1417
        %v1452 = vmul.f32 %v1381, %v1417
        %v1453 = vmul.f32 %v1382, %v1417
        %v1454 = vmul.f32 %v1383, %v1417
        %v1455 = vmul.f32 %v1384, %v1417
        %v1456 = vmul.f32 %v1385, %v1417
        %v1457 = vmul.f32 %v1386, %v1417
        %v1458 = vmul.f32 %v1387, %v1417
        %v1459 = vmul.f32 %v1388, %v1417
        %v1460 = vmul.f32 %v1389, %v1417
        %v1461 = vmul.f32 %v1390, %v1417
        %v1462 = vmul.f32 %v1391, %v1417
        %v1463 = vmul.f32 %v1392, %v1417
        %v1464 = vmul.f32 %v1393, %v1417
        %v1465 = vmul.f32 %v1394, %v1417
        %v1466 = vmul.f32 %v1395, %v1417
        %v1467 = vmul.f32 %v1396, %v1417
        %v1468 = vmul.f32 %v1397, %v1417
        %v1469 = vmul.f32 %v1398, %v1417
        %v1470 = vmul.f32 %v1399, %v1417
        %v1471 = vmul.f32 %v1400, %v1417
        %v1472 = vmul.f32 %v1401, %v1417
        %v1473 = vmul.f32 %v1402, %v1417
        %v1474 = vmul.f32 %v1403, %v1417
        %v1475 = vmul.f32 %v1404, %v1417
        %v1476 = vmul.f32 %v1405, %v1417
        %v1477 = vmul.f32 %v1406, %v1417
        %v1478 = vmul.f32 %v1407, %v1417
        %v1479 = vmul.f32 %v1408, %v1417
        %v1480 = vmul.f32 %v1409, %v1417
        %v1481 = vmul.f32 %v1410, %v1417
        %v1482 = vmul.f32 %v1411, %v1417
        %v1483 = vld [vmem:[#allocation6] sm:$0x1]
        %v1485 = vlaneseq
        %v1486 = vshrl.u32 %v1485, 7
        %v1487 = vsub.s32 0, %v1486
        %v1488 = vrot.slane %v1483, %v1487
        %v1490 = vadd.f32 %v1419, %v1488
        %v1491 = vadd.f32 %v1420, %v1488
        %v1492 = vadd.f32 %v1421, %v1488
        %v1493 = vadd.f32 %v1422, %v1488
        %v1494 = vadd.f32 %v1423, %v1488
        %v1495 = vadd.f32 %v1424, %v1488
        %v1496 = vadd.f32 %v1425, %v1488
        %v1497 = vadd.f32 %v1426, %v1488
        %v1498 = vadd.f32 %v1427, %v1488
        %v1499 = vadd.f32 %v1428, %v1488
        %v1500 = vadd.f32 %v1429, %v1488
        %v1501 = vadd.f32 %v1430, %v1488
        %v1502 = vadd.f32 %v1431, %v1488
        %v1503 = vadd.f32 %v1432, %v1488
        %v1504 = vadd.f32 %v1433, %v1488
        %v1505 = vadd.f32 %v1434, %v1488
        %v1506 = vadd.f32 %v1435, %v1488
        %v1507 = vadd.f32 %v1436, %v1488
        %v1508 = vadd.f32 %v1437, %v1488
        %v1509 = vadd.f32 %v1438, %v1488
        %v1510 = vadd.f32 %v1439, %v1488
        %v1511 = vadd.f32 %v1440, %v1488
        %v1512 = vadd.f32 %v1441, %v1488
        %v1513 = vadd.f32 %v1442, %v1488
        %v1514 = vadd.f32 %v1443, %v1488
        %v1515 = vadd.f32 %v1444, %v1488
        %v1516 = vadd.f32 %v1445, %v1488
        %v1517 = vadd.f32 %v1446, %v1488
        %v1518 = vadd.f32 %v1447, %v1488
        %v1519 = vadd.f32 %v1448, %v1488
        %v1520 = vadd.f32 %v1449, %v1488
        %v1521 = vadd.f32 %v1450, %v1488
        %v1522 = vadd.f32 %v1451, %v1488
        %v1523 = vadd.f32 %v1452, %v1488
        %v1524 = vadd.f32 %v1453, %v1488
        %v1525 = vadd.f32 %v1454, %v1488
        %v1526 = vadd.f32 %v1455, %v1488
        %v1527 = vadd.f32 %v1456, %v1488
        %v1528 = vadd.f32 %v1457, %v1488
        %v1529 = vadd.f32 %v1458, %v1488
        %v1530 = vadd.f32 %v1459, %v1488
        %v1531 = vadd.f32 %v1460, %v1488
        %v1532 = vadd.f32 %v1461, %v1488
        %v1533 = vadd.f32 %v1462, %v1488
        %v1534 = vadd.f32 %v1463, %v1488
        %v1535 = vadd.f32 %v1464, %v1488
        %v1536 = vadd.f32 %v1465, %v1488
        %v1537 = vadd.f32 %v1466, %v1488
        %v1538 = vadd.f32 %v1467, %v1488
        %v1539 = vadd.f32 %v1468, %v1488
        %v1540 = vadd.f32 %v1469, %v1488
        %v1541 = vadd.f32 %v1470, %v1488
        %v1542 = vadd.f32 %v1471, %v1488
        %v1543 = vadd.f32 %v1472, %v1488
        %v1544 = vadd.f32 %v1473, %v1488
        %v1545 = vadd.f32 %v1474, %v1488
        %v1546 = vadd.f32 %v1475, %v1488
        %v1547 = vadd.f32 %v1476, %v1488
        %v1548 = vadd.f32 %v1477, %v1488
        %v1549 = vadd.f32 %v1478, %v1488
        %v1550 = vadd.f32 %v1479, %v1488
        %v1551 = vadd.f32 %v1480, %v1488
        %v1552 = vadd.f32 %v1481, %v1488
        %v1553 = vadd.f32 %v1482, %v1488
        %vm1554 = vcmp.ge.f32.partialorder %v1490, 0.0
        %vm1555 = vcmp.ge.f32.partialorder %v1491, 0.0
        %vm1556 = vcmp.ge.f32.partialorder %v1492, 0.0
        %vm1557 = vcmp.ge.f32.partialorder %v1493, 0.0
        %vm1558 = vcmp.ge.f32.partialorder %v1494, 0.0
        %vm1559 = vcmp.ge.f32.partialorder %v1495, 0.0
        %vm1560 = vcmp.ge.f32.partialorder %v1496, 0.0
        %vm1561 = vcmp.ge.f32.partialorder %v1497, 0.0
        %vm1562 = vcmp.ge.f32.partialorder %v1498, 0.0
        %vm1563 = vcmp.ge.f32.partialorder %v1499, 0.0
        %vm1564 = vcmp.ge.f32.partialorder %v1500, 0.0
        %vm1565 = vcmp.ge.f32.partialorder %v1501, 0.0
        %vm1566 = vcmp.ge.f32.partialorder %v1502, 0.0
        %vm1567 = vcmp.ge.f32.partialorder %v1503, 0.0
        %vm1568 = vcmp.ge.f32.partialorder %v1504, 0.0
        %vm1569 = vcmp.ge.f32.partialorder %v1505, 0.0
        %vm1570 = vcmp.ge.f32.partialorder %v1506, 0.0
        %vm1571 = vcmp.ge.f32.partialorder %v1507, 0.0
        %vm1572 = vcmp.ge.f32.partialorder %v1508, 0.0
        %vm1573 = vcmp.ge.f32.partialorder %v1509, 0.0
        %vm1574 = vcmp.ge.f32.partialorder %v1510, 0.0
        %vm1575 = vcmp.ge.f32.partialorder %v1511, 0.0
        %vm1576 = vcmp.ge.f32.partialorder %v1512, 0.0
        %vm1577 = vcmp.ge.f32.partialorder %v1513, 0.0
        %vm1578 = vcmp.ge.f32.partialorder %v1514, 0.0
        %vm1579 = vcmp.ge.f32.partialorder %v1515, 0.0
        %vm1580 = vcmp.ge.f32.partialorder %v1516, 0.0
        %vm1581 = vcmp.ge.f32.partialorder %v1517, 0.0
        %vm1582 = vcmp.ge.f32.partialorder %v1518, 0.0
        %vm1583 = vcmp.ge.f32.partialorder %v1519, 0.0
        %vm1584 = vcmp.ge.f32.partialorder %v1520, 0.0
        %vm1585 = vcmp.ge.f32.partialorder %v1521, 0.0
        %vm1586 = vcmp.ge.f32.partialorder %v1522, 0.0
        %vm1587 = vcmp.ge.f32.partialorder %v1523, 0.0
        %vm1588 = vcmp.ge.f32.partialorder %v1524, 0.0
        %vm1589 = vcmp.ge.f32.partialorder %v1525, 0.0
        %vm1590 = vcmp.ge.f32.partialorder %v1526, 0.0
        %vm1591 = vcmp.ge.f32.partialorder %v1527, 0.0
        %vm1592 = vcmp.ge.f32.partialorder %v1528, 0.0
        %vm1593 = vcmp.ge.f32.partialorder %v1529, 0.0
        %vm1594 = vcmp.ge.f32.partialorder %v1530, 0.0
        %vm1595 = vcmp.ge.f32.partialorder %v1531, 0.0
        %vm1596 = vcmp.ge.f32.partialorder %v1532, 0.0
        %vm1597 = vcmp.ge.f32.partialorder %v1533, 0.0
        %vm1598 = vcmp.ge.f32.partialorder %v1534, 0.0
        %vm1599 = vcmp.ge.f32.partialorder %v1535, 0.0
        %vm1600 = vcmp.ge.f32.partialorder %v1536, 0.0
        %vm1601 = vcmp.ge.f32.partialorder %v1537, 0.0
        %vm1602 = vcmp.ge.f32.partialorder %v1538, 0.0
        %vm1603 = vcmp.ge.f32.partialorder %v1539, 0.0
        %vm1604 = vcmp.ge.f32.partialorder %v1540, 0.0
        %vm1605 = vcmp.ge.f32.partialorder %v1541, 0.0
        %vm1606 = vcmp.ge.f32.partialorder %v1542, 0.0
        %vm1607 = vcmp.ge.f32.partialorder %v1543, 0.0
        %vm1608 = vcmp.ge.f32.partialorder %v1544, 0.0
        %vm1609 = vcmp.ge.f32.partialorder %v1545, 0.0
        %vm1610 = vcmp.ge.f32.partialorder %v1546, 0.0
        %vm1611 = vcmp.ge.f32.partialorder %v1547, 0.0
        %vm1612 = vcmp.ge.f32.partialorder %v1548, 0.0
        %vm1613 = vcmp.ge.f32.partialorder %v1549, 0.0
        %vm1614 = vcmp.ge.f32.partialorder %v1550, 0.0
        %vm1615 = vcmp.ge.f32.partialorder %v1551, 0.0
        %vm1616 = vcmp.ge.f32.partialorder %v1552, 0.0
        %vm1617 = vcmp.ge.f32.partialorder %v1553, 0.0
        %v1618 = vmul.f32 %v1490, 0.2
        %v1619 = vmul.f32 %v1491, 0.2
        %v1620 = vmul.f32 %v1492, 0.2
        %v1621 = vmul.f32 %v1493, 0.2
        %v1622 = vmul.f32 %v1494, 0.2
        %v1623 = vmul.f32 %v1495, 0.2
        %v1624 = vmul.f32 %v1496, 0.2
        %v1625 = vmul.f32 %v1497, 0.2
        %v1626 = vmul.f32 %v1498, 0.2
        %v1627 = vmul.f32 %v1499, 0.2
        %v1628 = vmul.f32 %v1500, 0.2
        %v1629 = vmul.f32 %v1501, 0.2
        %v1630 = vmul.f32 %v1502, 0.2
        %v1631 = vmul.f32 %v1503, 0.2
        %v1632 = vmul.f32 %v1504, 0.2
        %v1633 = vmul.f32 %v1505, 0.2
        %v1634 = vmul.f32 %v1506, 0.2
        %v1635 = vmul.f32 %v1507, 0.2
        %v1636 = vmul.f32 %v1508, 0.2
        %v1637 = vmul.f32 %v1509, 0.2
        %v1638 = vmul.f32 %v1510, 0.2
        %v1639 = vmul.f32 %v1511, 0.2
        %v1640 = vmul.f32 %v1512, 0.2
        %v1641 = vmul.f32 %v1513, 0.2
        %v1642 = vmul.f32 %v1514, 0.2
        %v1643 = vmul.f32 %v1515, 0.2
        %v1644 = vmul.f32 %v1516, 0.2
        %v1645 = vmul.f32 %v1517, 0.2
        %v1646 = vmul.f32 %v1518, 0.2
        %v1647 = vmul.f32 %v1519, 0.2
        %v1648 = vmul.f32 %v1520, 0.2
        %v1649 = vmul.f32 %v1521, 0.2
        %v1650 = vmul.f32 %v1522, 0.2
        %v1651 = vmul.f32 %v1523, 0.2
        %v1652 = vmul.f32 %v1524, 0.2
        %v1653 = vmul.f32 %v1525, 0.2
        %v1654 = vmul.f32 %v1526, 0.2
        %v1655 = vmul.f32 %v1527, 0.2
        %v1656 = vmul.f32 %v1528, 0.2
        %v1657 = vmul.f32 %v1529, 0.2
        %v1658 = vmul.f32 %v1530, 0.2
        %v1659 = vmul.f32 %v1531, 0.2
        %v1660 = vmul.f32 %v1532, 0.2
        %v1661 = vmul.f32 %v1533, 0.2
        %v1662 = vmul.f32 %v1534, 0.2
        %v1663 = vmul.f32 %v1535, 0.2
        %v1664 = vmul.f32 %v1536, 0.2
        %v1665 = vmul.f32 %v1537, 0.2
        %v1666 = vmul.f32 %v1538, 0.2
        %v1667 = vmul.f32 %v1539, 0.2
        %v1668 = vmul.f32 %v1540, 0.2
        %v1669 = vmul.f32 %v1541, 0.2
        %v1670 = vmul.f32 %v1542, 0.2
        %v1671 = vmul.f32 %v1543, 0.2
        %v1672 = vmul.f32 %v1544, 0.2
        %v1673 = vmul.f32 %v1545, 0.2
        %v1674 = vmul.f32 %v1546, 0.2
        %v1675 = vmul.f32 %v1547, 0.2
        %v1676 = vmul.f32 %v1548, 0.2
        %v1677 = vmul.f32 %v1549, 0.2
        %v1678 = vmul.f32 %v1550, 0.2
        %v1679 = vmul.f32 %v1551, 0.2
        %v1680 = vmul.f32 %v1552, 0.2
        %v1681 = vmul.f32 %v1553, 0.2
        %v1682 = vsel %vm1554, %v1490, %v1618
        %v1683 = vsel %vm1555, %v1491, %v1619
        %v1684 = vsel %vm1556, %v1492, %v1620
        %v1685 = vsel %vm1557, %v1493, %v1621
        %v1686 = vsel %vm1558, %v1494, %v1622
        %v1687 = vsel %vm1559, %v1495, %v1623
        %v1688 = vsel %vm1560, %v1496, %v1624
        %v1689 = vsel %vm1561, %v1497, %v1625
        %v1690 = vsel %vm1562, %v1498, %v1626
        %v1691 = vsel %vm1563, %v1499, %v1627
        %v1692 = vsel %vm1564, %v1500, %v1628
        %v1693 = vsel %vm1565, %v1501, %v1629
        %v1694 = vsel %vm1566, %v1502, %v1630
        %v1695 = vsel %vm1567, %v1503, %v1631
        %v1696 = vsel %vm1568, %v1504, %v1632
        %v1697 = vsel %vm1569, %v1505, %v1633
        %v1698 = vsel %vm1570, %v1506, %v1634
        %v1699 = vsel %vm1571, %v1507, %v1635
        %v1700 = vsel %vm1572, %v1508, %v1636
        %v1701 = vsel %vm1573, %v1509, %v1637
        %v1702 = vsel %vm1574, %v1510, %v1638
        %v1703 = vsel %vm1575, %v1511, %v1639
        %v1704 = vsel %vm1576, %v1512, %v1640
        %v1705 = vsel %vm1577, %v1513, %v1641
        %v1706 = vsel %vm1578, %v1514, %v1642
        %v1707 = vsel %vm1579, %v1515, %v1643
        %v1708 = vsel %vm1580, %v1516, %v1644
        %v1709 = vsel %vm1581, %v1517, %v1645
        %v1710 = vsel %vm1582, %v1518, %v1646
        %v1711 = vsel %vm1583, %v1519, %v1647
        %v1712 = vsel %vm1584, %v1520, %v1648
        %v1713 = vsel %vm1585, %v1521, %v1649
        %v1714 = vsel %vm1586, %v1522, %v1650
        %v1715 = vsel %vm1587, %v1523, %v1651
        %v1716 = vsel %vm1588, %v1524, %v1652
        %v1717 = vsel %vm1589, %v1525, %v1653
        %v1718 = vsel %vm1590, %v1526, %v1654
        %v1719 = vsel %vm1591, %v1527, %v1655
        %v1720 = vsel %vm1592, %v1528, %v1656
        %v1721 = vsel %vm1593, %v1529, %v1657
        %v1722 = vsel %vm1594, %v1530, %v1658
        %v1723 = vsel %vm1595, %v1531, %v1659
        %v1724 = vsel %vm1596, %v1532, %v1660
        %v1725 = vsel %vm1597, %v1533, %v1661
        %v1726 = vsel %vm1598, %v1534, %v1662
        %v1727 = vsel %vm1599, %v1535, %v1663
        %v1728 = vsel %vm1600, %v1536, %v1664
        %v1729 = vsel %vm1601, %v1537, %v1665
        %v1730 = vsel %vm1602, %v1538, %v1666
        %v1731 = vsel %vm1603, %v1539, %v1667
        %v1732 = vsel %vm1604, %v1540, %v1668
        %v1733 = vsel %vm1605, %v1541, %v1669
        %v1734 = vsel %vm1606, %v1542, %v1670
        %v1735 = vsel %vm1607, %v1543, %v1671
        %v1736 = vsel %vm1608, %v1544, %v1672
        %v1737 = vsel %vm1609, %v1545, %v1673
        %v1738 = vsel %vm1610, %v1546, %v1674
        %v1739 = vsel %vm1611, %v1547, %v1675
        %v1740 = vsel %vm1612, %v1548, %v1676
        %v1741 = vsel %vm1613, %v1549, %v1677
        %v1742 = vsel %vm1614, %v1550, %v1678
        %v1743 = vsel %vm1615, %v1551, %v1679
        %v1744 = vsel %vm1616, %v1552, %v1680
        %v1745 = vsel %vm1617, %v1553, %v1681
        %1746 = vst [vmem:[%s232] sm:$0xff] %v1682
        %1747 = vst [vmem:[%s232 + $0x8] sm:$0xff] %v1683
        %1748 = vst [vmem:[%s232 + $0x10] sm:$0xff] %v1684
        %1749 = vst [vmem:[%s232 + $0x18] sm:$0xff] %v1685
        %1750 = vst [vmem:[%s232 + $0x20] sm:$0xff] %v1686
        %1751 = vst [vmem:[%s232 + $0x28] sm:$0xff] %v1687
        %1752 = vst [vmem:[%s232 + $0x30] sm:$0xff] %v1688
        %1753 = vst [vmem:[%s232 + $0x38] sm:$0xff] %v1689
        %1754 = vst [vmem:[%s232 + $0x40] sm:$0xff] %v1690
        %1755 = vst [vmem:[%s232 + $0x48] sm:$0xff] %v1691
        %1756 = vst [vmem:[%s232 + $0x50] sm:$0xff] %v1692
        %1757 = vst [vmem:[%s232 + $0x58] sm:$0xff] %v1693
        %1758 = vst [vmem:[%s232 + $0x60] sm:$0xff] %v1694
        %1759 = vst [vmem:[%s232 + $0x68] sm:$0xff] %v1695
        %1760 = vst [vmem:[%s232 + $0x70] sm:$0xff] %v1696
        %1761 = vst [vmem:[%s232 + $0x78] sm:$0xff] %v1697
        %1762 = vst [vmem:[%s232 + $0x80] sm:$0xff] %v1698
        %1763 = vst [vmem:[%s232 + $0x88] sm:$0xff] %v1699
        %1764 = vst [vmem:[%s232 + $0x90] sm:$0xff] %v1700
        %1765 = vst [vmem:[%s232 + $0x98] sm:$0xff] %v1701
        %1766 = vst [vmem:[%s232 + $0xa0] sm:$0xff] %v1702
        %1767 = vst [vmem:[%s232 + $0xa8] sm:$0xff] %v1703
        %1768 = vst [vmem:[%s232 + $0xb0] sm:$0xff] %v1704
        %1769 = vst [vmem:[%s232 + $0xb8] sm:$0xff] %v1705
        %1770 = vst [vmem:[%s232 + $0xc0] sm:$0xff] %v1706
        %1771 = vst [vmem:[%s232 + $0xc8] sm:$0xff] %v1707
        %1772 = vst [vmem:[%s232 + $0xd0] sm:$0xff] %v1708
        %1773 = vst [vmem:[%s232 + $0xd8] sm:$0xff] %v1709
        %1774 = vst [vmem:[%s232 + $0xe0] sm:$0xff] %v1710
        %1775 = vst [vmem:[%s232 + $0xe8] sm:$0xff] %v1711
        %1776 = vst [vmem:[%s232 + $0xf0] sm:$0xff] %v1712
        %1777 = vst [vmem:[%s232 + $0xf8] sm:$0xff] %v1713
        %1778 = vst [vmem:[%s232 + $0x100] sm:$0xff] %v1714
        %1779 = vst [vmem:[%s232 + $0x108] sm:$0xff] %v1715
        %1780 = vst [vmem:[%s232 + $0x110] sm:$0xff] %v1716
        %1781 = vst [vmem:[%s232 + $0x118] sm:$0xff] %v1717
        %1782 = vst [vmem:[%s232 + $0x120] sm:$0xff] %v1718
        %1783 = vst [vmem:[%s232 + $0x128] sm:$0xff] %v1719
        %1784 = vst [vmem:[%s232 + $0x130] sm:$0xff] %v1720
        %1785 = vst [vmem:[%s232 + $0x138] sm:$0xff] %v1721
        %1786 = vst [vmem:[%s232 + $0x140] sm:$0xff] %v1722
        %1787 = vst [vmem:[%s232 + $0x148] sm:$0xff] %v1723
        %1788 = vst [vmem:[%s232 + $0x150] sm:$0xff] %v1724
        %1789 = vst [vmem:[%s232 + $0x158] sm:$0xff] %v1725
        %1790 = vst [vmem:[%s232 + $0x160] sm:$0xff] %v1726
        %1791 = vst [vmem:[%s232 + $0x168] sm:$0xff] %v1727
        %1792 = vst [vmem:[%s232 + $0x170] sm:$0xff] %v1728
        %1793 = vst [vmem:[%s232 + $0x178] sm:$0xff] %v1729
        %1794 = vst [vmem:[%s232 + $0x180] sm:$0xff] %v1730
        %1795 = vst [vmem:[%s232 + $0x188] sm:$0xff] %v1731
        %1796 = vst [vmem:[%s232 + $0x190] sm:$0xff] %v1732
        %1797 = vst [vmem:[%s232 + $0x198] sm:$0xff] %v1733
        %1798 = vst [vmem:[%s232 + $0x1a0] sm:$0xff] %v1734
        %1799 = vst [vmem:[%s232 + $0x1a8] sm:$0xff] %v1735
        %1800 = vst [vmem:[%s232 + $0x1b0] sm:$0xff] %v1736
        %1801 = vst [vmem:[%s232 + $0x1b8] sm:$0xff] %v1737
        %1802 = vst [vmem:[%s232 + $0x1c0] sm:$0xff] %v1738
        %1803 = vst [vmem:[%s232 + $0x1c8] sm:$0xff] %v1739
        %1804 = vst [vmem:[%s232 + $0x1d0] sm:$0xff] %v1740
        %1805 = vst [vmem:[%s232 + $0x1d8] sm:$0xff] %v1741
        %1806 = vst [vmem:[%s232 + $0x1e0] sm:$0xff] %v1742
        %1807 = vst [vmem:[%s232 + $0x1e8] sm:$0xff] %v1743
        %1808 = vst [vmem:[%s232 + $0x1f0] sm:$0xff] %v1744
        %1809 = vst [vmem:[%s232 + $0x1f8] sm:$0xff] %v1745
      $region48: #{encoder3d_forward.1} parent=35 // pred_fallthru
        _
      %s1810 = smul.u32 %s19, %s20
      %s1811 = smul.u32 64, %s1810
      %p1812 = scmp.lt.s32.totalorder %s1811, 127
      %s1813 = scalar_select %p1812, %s1811, 127
      %s1814 = smul.addr %s1813, 8
      %s1815 = scalar_lea.vmem %s4, %s1814
      // Predicated region
      $region53: #{encoder3d_forward.1} parent=35 // pred_check
        %p1816 = pneg %p140
      $region54: #{encoder3d_forward.1} parent=35 // pred_check_branch
        %1818 = sbr.rel (%p1816) target = $region56
      $region55: #{encoder3d_forward.1} parent=35 // pred_region
        %s1819 = smul.u32 %s19, %s20
        %s1820 = smul.u32 64, %s1819
      $region56: #{encoder3d_forward.1} parent=35 // pred_fallthru
        _
    $region36: #{encoder3d_forward.1} parent=5 // pred_fallthru
      _
    %p1821 = scmp.le.s32.totalorder 2, %s10
    // Predicated region
    $region57: #{encoder3d_forward.1} parent=5 // pred_check
      %p1822 = pneg %p1821
    $region58: #{encoder3d_forward.1} parent=5 // pred_check_branch
      %1824 = sbr.rel (%p1822) target = $region60
    $region59: #{encoder3d_forward.1} parent=5 // pred_region
      %s1825 = ssub.s32 %s10, 2
      // Predicated region
      $region61: #{encoder3d_forward.1} parent=59 // pred_check
        %p1826 = pneg %p146
      $region62: #{encoder3d_forward.1} parent=59 // pred_check_branch
        %1828 = sbr.rel (%p1826) target = $region64
      $region63: #{encoder3d_forward.1} parent=59 // pred_region
        %s1829 = smul.u32 %s21, %s22
        %s1830 = smul.u32 64, %s1829
        %p1831 = scmp.lt.s32.totalorder %s1830, 127
        %s1832 = scalar_select %p1831, %s1830, 127
        %s1833 = smul.addr %s1832, 8
        %s1834 = scalar_lea.vmem %s4, %s1833
      $region64: #{encoder3d_forward.1} parent=59 // pred_fallthru
        _
    $region60: #{encoder3d_forward.1} parent=5 // pred_fallthru
      _
  $region6: #{encoder3d_forward.1} parent=0 // loop_footer
    %s14 = sadd.s32 1, %s10
  $region7: #{encoder3d_forward.1} parent=0 // loop_footer_branch
    %9 = sbr.rel target = $region3
  $region8: #{encoder3d_forward.1} parent=0 // loop_exit
    _

</llo_original>
